<compile_context>
chip_gen: v7x
topology: tpu7x:2x2x1
jax: 0.10.0
libtpu: 0.0.40
codegen_flags: <defaults>
</compile_context>

<pallas_src>
import functools

import jax
import jax.numpy as jnp
from jax.experimental import pallas as pl
from jax.experimental.pallas import tpu as pltpu


def _round_up(x, m):
    return ((x + m - 1) // m) * m


# ------------------------- fused Pallas kernel -------------------------

def _inception_kernel(x_ref, cmask_ref,
                      w1_ref, b1_ref,
                      w2a_ref, b2a_ref, w2b_ref, b2b_ref,
                      w3a_ref, b3a_ref, w3b_ref, b3b_ref,
                      w4_ref, b4_ref,
                      o_ref,
                      xbuf_ref, stk_ref,
                      *, H, W, P, FLAT, OUT):
    """One batch image per grid step.

    x_ref:     (Cin, H*W)       raw image, spatial flattened on lanes (h*W+w)
    cmask_ref: (2P+1, OUT)      column-validity masks for lane shifts -P..P
    o_ref:     (Ctot, OUT)      concatenated branch outputs at flat idx h*W+w
    xbuf_ref:  (Cin, FLAT)      VMEM scratch: row-padded image buffer
    stk_ref:   (KMAX, OUT)      VMEM scratch: stacked conv taps (contraction)
    """
    base = P + P * W                    # buffer lane of output position (0, 0)
    lo, hi = base, base + H * W         # interior (real image) lanes in xbuf

    # ---- build the zero-row-padded image buffer in VMEM (no wrapper pads) ---
    xbuf_ref[...] = jnp.zeros_like(xbuf_ref)
    xbuf_ref[:, lo:hi] = x_ref[...]
    x = xbuf_ref[...]                                        # (Cin, FLAT)

    cmf = cmask_ref[...]                                     # (2P+1, OUT) f32
    lane = jax.lax.broadcasted_iota(jnp.int32, (1, FLAT), 1)
    interior = (lane >= lo) & (lane < hi)                    # (1, FLAT) bool

    def conv1x1(w_ref, b_ref, feat):
        # relu(W @ feat + b): lane-dense MXU matmul, channels on sublanes.
        return jnp.maximum(
            jnp.dot(w_ref[...], feat, preferred_element_type=jnp.float32)
            + b_ref[...], 0.0)

    def conv_kxk(wk_ref, bk_ref, feat, k, pc):
        # ONE wide-K matmul per conv: stack the k*k shifted taps of `feat`
        # (column-boundary padding applied via cmask) along the contraction
        # (sublane) axis in VMEM, then a single (Cout, k*k*Cred) @ (k*k*Cred,
        # OUT) dot.  Row-boundary padding comes from the zero rows in xbuf /
        # the interior-masked intermediates.
        cred = feat.shape[0]
        for di in range(k):
            for dj in range(k):
                off = base + (di - pc) * W + (dj - pc)
                tap = feat[:, off:off + OUT]
                if dj != pc:                       # skip the all-ones mask row
                    tap = tap * cmf[dj - pc + P:dj - pc + P + 1, :]
                t = di * k + dj
                stk_ref[t * cred:(t + 1) * cred, :] = tap
        return jnp.maximum(
            jnp.dot(wk_ref[...], stk_ref[0:k * k * cred, :],
                    preferred_element_type=jnp.float32) + bk_ref[...], 0.0)

    # ---- branch 1: 1x1 conv + ReLU ----
    br1 = conv1x1(w1_ref, b1_ref, x[:, base:base + OUT])

    # ---- branch 2: 1x1 reduce + ReLU -> 3x3 conv (pad=1) + ReLU ----
    mid2 = jnp.where(interior, conv1x1(w2a_ref, b2a_ref, x), 0.0)
    br2 = conv_kxk(w2b_ref, b2b_ref, mid2, 3, 1)

    # ---- branch 3: 1x1 reduce + ReLU -> 5x5 conv (pad=2) + ReLU ----
    mid3 = jnp.where(interior, conv1x1(w3a_ref, b3a_ref, x), 0.0)
    br3 = conv_kxk(w3b_ref, b3b_ref, mid3, 5, 2)

    # ---- branch 4: MaxPool2d(3, stride=1, pad=1) (-inf padding) -> 1x1+ReLU -
    xneg = jnp.where(interior, x, -1e30)                     # padding -> -1e30
    pooled = None
    for di in range(3):
        for dj in range(3):
            off = base + (di - 1) * W + (dj - 1)
            sl = xneg[:, off:off + OUT]
            if dj != 1:
                sl = jnp.where(cmf[dj - 1 + P:dj + P, :] > 0.5, sl, -1e30)
            pooled = sl if pooled is None else jnp.maximum(pooled, sl)
    br4 = conv1x1(w4_ref, b4_ref, pooled)

    # ---- fused channel concat: lane-dense (128-multiple) stores ----
    c1, c2, c3, c4 = br1.shape[0], br2.shape[0], br3.shape[0], br4.shape[0]
    o_ref[0:c1, :] = br1
    o_ref[c1:c1 + c2, :] = br2
    o_ref[c1 + c2:c1 + c2 + c3, :] = br3
    o_ref[c1 + c2 + c3:c1 + c2 + c3 + c4, :] = br4


# ------------------------- wrapper -------------------------

def inception_block_forward(x_nchw, params):
    """params = ((w1,b1),(w2a,b2a),(w2b,b2b),(w3a,b3a),(w3b,b3b),(w4,b4)),
    conv weights in PyTorch OIHW layout, biases 1-D.  Returns NCHW output."""
    (w1, b1), (w2a, b2a), (w2b, b2b), (w3a, b3a), (w3b, b3b), (w4, b4) = params
    N, Cin, H, W = x_nchw.shape
    P = 2                                     # max conv padding (5x5 branch)
    HW = H * W
    OUT = _round_up(HW, 128)                  # lane-dense output width
    # buffer: P fringe + 2P padded rows above/below image + OUT-wide tap reads
    FLAT = _round_up(max(2 * P + (H + 2 * P) * W, 2 * P + 2 * P * W + OUT), 128)

    x_flat = x_nchw.reshape(N, Cin, HW)       # contiguous reshape (free)

    # column-validity masks for lane (column) shifts dc in [-P, P]
    col = jnp.arange(OUT, dtype=jnp.int32) % W
    cmask = jnp.stack(
        [((col + dc >= 0) & (col + dc < W)) for dc in range(-P, P + 1)]
    ).astype(jnp.float32)                     # (2P+1, OUT)

    C1, C2a, C2b = w1.shape[0], w2a.shape[0], w2b.shape[0]
    C3a, C3b, C4 = w3a.shape[0], w3b.shape[0], w4.shape[0]
    Ctot = C1 + C2b + C3b + C4
    KMAX = max(9 * C2a, 25 * C3a)             # stacked-tap contraction rows

    # weight/bias layout glue (tiny): 1x1 -> (Cout, Cin);
    # KxK -> (Cout, K*K*Cin) matching the tap-major stack (row t*Cin + c).
    w1m = w1.reshape(C1, Cin)
    w2am = w2a.reshape(C2a, Cin)
    w3am = w3a.reshape(C3a, Cin)
    w4m = w4.reshape(C4, Cin)
    w2bm = jnp.transpose(w2b, (0, 2, 3, 1)).reshape(C2b, 9 * C2a)
    w3bm = jnp.transpose(w3b, (0, 2, 3, 1)).reshape(C3b, 25 * C3a)
    col_b = lambda b: b.reshape(-1, 1)

    kernel = functools.partial(_inception_kernel, H=H, W=W, P=P,
                               FLAT=FLAT, OUT=OUT)

    def const(shape):
        nd = len(shape)
        return pl.BlockSpec(shape, lambda n, _nd=nd: (0,) * _nd)

    out_flat = pl.pallas_call(
        kernel,
        out_shape=jax.ShapeDtypeStruct((N, Ctot, OUT), jnp.float32),
        grid=(N,),
        in_specs=[
            pl.BlockSpec((None, Cin, HW), lambda n: (n, 0, 0)),
            const((2 * P + 1, OUT)),
            const((C1, Cin)), const((C1, 1)),
            const((C2a, Cin)), const((C2a, 1)),
            const((C2b, 9 * C2a)), const((C2b, 1)),
            const((C3a, Cin)), const((C3a, 1)),
            const((C3b, 25 * C3a)), const((C3b, 1)),
            const((C4, Cin)), const((C4, 1)),
        ],
        out_specs=pl.BlockSpec((None, Ctot, OUT), lambda n: (n, 0, 0)),
        scratch_shapes=[pltpu.VMEM((Cin, FLAT), jnp.float32),
                        pltpu.VMEM((KMAX, OUT), jnp.float32)],
        compiler_params=pltpu.CompilerParams(
            dimension_semantics=("parallel",)),
    )(x_flat, cmask,
      w1m, col_b(b1), w2am, col_b(b2a), w2bm, col_b(b2b),
      w3am, col_b(b3a), w3bm, col_b(b3b), w4m, col_b(b4))

    # Output is already de-haloed (flat idx h*W + w).  When H*W is a multiple
    # of 128 (demo: 256) the slice is a no-op and the reshape is free.
    return out_flat[:, :, :HW].reshape(N, Ctot, H, W)


# ------------------------- demo / check -------------------------

if __name__ == "__main__":
    key = jax.random.PRNGKey(0)
    keys = jax.random.split(key, 8)

    # InceptionBlock(b1=8, b2=(4,16), b3=(4,8), b4=8), input (2, 4, 16, 16)
    N, Cin, H, W = 2, 4, 16, 16
    b1_nch, b2_nch, b3_nch, b4_nch = 8, (4, 16), (4, 8), 8

    def make_conv(k, cout, cin, ks):
        bound = 1.0 / (cin * ks * ks) ** 0.5
        kw, kb = jax.random.split(k)
        w = jax.random.uniform(kw, (cout, cin, ks, ks),
                               minval=-bound, maxval=bound, dtype=jnp.float32)
        b = jax.random.uniform(kb, (cout,),
                               minval=-bound, maxval=bound, dtype=jnp.float32)
        return w, b

    x = jax.random.normal(keys[0], (N, Cin, H, W), dtype=jnp.float32)
    w1, b1 = make_conv(keys[1], b1_nch, Cin, 1)
    w2a, b2a = make_conv(keys[2], b2_nch[0], Cin, 1)
    w2b, b2b = make_conv(keys[3], b2_nch[1], b2_nch[0], 3)
    w3a, b3a = make_conv(keys[4], b3_nch[0], Cin, 1)
    w3b, b3b = make_conv(keys[5], b3_nch[1], b3_nch[0], 5)
    w4, b4 = make_conv(keys[6], b4_nch, Cin, 1)

    params = ((w1, b1), (w2a, b2a), (w2b, b2b),
              (w3a, b3a), (w3b, b3b), (w4, b4))

    out = inception_block_forward(x, params)
    out = jax.block_until_ready(out)

    # Pure-JAX reference (same semantics as the PyTorch module's forward).
    def conv_relu(x_, w_, b_, pad):
        y = jax.lax.conv_general_dilated(
            x_, w_, (1, 1), ((pad, pad), (pad, pad)),
            dimension_numbers=("NCHW", "OIHW", "NCHW"))
        return jnp.maximum(y + b_[None, :, None, None], 0.0)

    r1 = conv_relu(x, w1, b1, 0)
    r2 = conv_relu(conv_relu(x, w2a, b2a, 0), w2b, b2b, 1)
    r3 = conv_relu(conv_relu(x, w3a, b3a, 0), w3b, b3b, 2)
    pooled = jax.lax.reduce_window(x, -jnp.inf, jax.lax.max,
                                   (1, 1, 3, 3), (1, 1, 1, 1),
                                   ((0, 0), (0, 0), (1, 1), (1, 1)))
    r4 = conv_relu(pooled, w4, b4, 0)
    ref = jnp.concatenate([r1, r2, r3, r4], axis=1)

    assert out.shape == ref.shape, (out.shape, ref.shape)
    err = float(jnp.max(jnp.abs(out - ref)))
    assert err < 1e-4, err
    print("KERNEL_OK")
</pallas_src>

<mosaic_0001>
module attributes {stable_mosaic.version = 11 : i64} {
  func.func @_inception_kernel(%arg0: i32, %arg1: memref<1x4x256xf32, #tpu.memory_space<vmem>>, %arg2: memref<5x256xf32, #tpu.memory_space<vmem>>, %arg3: memref<8x4xf32, #tpu.memory_space<vmem>>, %arg4: memref<8x1xf32, #tpu.memory_space<vmem>>, %arg5: memref<4x4xf32, #tpu.memory_space<vmem>>, %arg6: memref<4x1xf32, #tpu.memory_space<vmem>>, %arg7: memref<16x36xf32, #tpu.memory_space<vmem>>, %arg8: memref<16x1xf32, #tpu.memory_space<vmem>>, %arg9: memref<4x4xf32, #tpu.memory_space<vmem>>, %arg10: memref<4x1xf32, #tpu.memory_space<vmem>>, %arg11: memref<8x100xf32, #tpu.memory_space<vmem>>, %arg12: memref<8x1xf32, #tpu.memory_space<vmem>>, %arg13: memref<8x4xf32, #tpu.memory_space<vmem>>, %arg14: memref<8x1xf32, #tpu.memory_space<vmem>>, %arg15: memref<1x40x256xf32, #tpu.memory_space<vmem>>, %arg16: memref<4x384xf32, #tpu.memory_space<vmem>>, %arg17: memref<100x256xf32, #tpu.memory_space<vmem>>) attributes {dimension_semantics = [#tpu.dimension_semantics<parallel>], iteration_bounds = array<i64: 2>, scalar_prefetch = 0 : i64, scratch_operands = 2 : i64, tpu.core_type = #tpu.core_type<tc>, window_params = [{transform_indices = @transform_0, window_bounds = array<i64: 1, 4, 256>}, {pipeline_mode = #tpu.pipeline_mode<synchronous>, transform_indices = @transform_1, window_bounds = array<i64: 5, 256>}, {pipeline_mode = #tpu.pipeline_mode<synchronous>, transform_indices = @transform_2, window_bounds = array<i64: 8, 4>}, {pipeline_mode = #tpu.pipeline_mode<synchronous>, transform_indices = @transform_3, window_bounds = array<i64: 8, 1>}, {pipeline_mode = #tpu.pipeline_mode<synchronous>, transform_indices = @transform_4, window_bounds = array<i64: 4, 4>}, {pipeline_mode = #tpu.pipeline_mode<synchronous>, transform_indices = @transform_5, window_bounds = array<i64: 4, 1>}, {pipeline_mode = #tpu.pipeline_mode<synchronous>, transform_indices = @transform_6, window_bounds = array<i64: 16, 36>}, {pipeline_mode = #tpu.pipeline_mode<synchronous>, transform_indices = @transform_7, window_bounds = array<i64: 16, 1>}, {pipeline_mode = #tpu.pipeline_mode<synchronous>, transform_indices = @transform_8, window_bounds = array<i64: 4, 4>}, {pipeline_mode = #tpu.pipeline_mode<synchronous>, transform_indices = @transform_9, window_bounds = array<i64: 4, 1>}, {pipeline_mode = #tpu.pipeline_mode<synchronous>, transform_indices = @transform_10, window_bounds = array<i64: 8, 100>}, {pipeline_mode = #tpu.pipeline_mode<synchronous>, transform_indices = @transform_11, window_bounds = array<i64: 8, 1>}, {pipeline_mode = #tpu.pipeline_mode<synchronous>, transform_indices = @transform_12, window_bounds = array<i64: 8, 4>}, {pipeline_mode = #tpu.pipeline_mode<synchronous>, transform_indices = @transform_13, window_bounds = array<i64: 8, 1>}, {transform_indices = @transform_14, window_bounds = array<i64: 1, 40, 256>}]} {
    %cst = arith.constant 0.000000e+00 : f32
    %0 = vector.broadcast %cst : f32 to vector<4x384xf32>
    %c0 = arith.constant 0 : index
    %c0_0 = arith.constant 0 : index
    %1 = vector.load %arg16[%c0, %c0_0] : memref<4x384xf32, #tpu.memory_space<vmem>>, vector<4x384xf32>
    tpu.vector_store %arg16[%c0, %c0_0], %0 {strides = array<i32>} : memref<4x384xf32, #tpu.memory_space<vmem>>, vector<4x384xf32>,
    %c0_1 = arith.constant 0 : index
    %c0_2 = arith.constant 0 : index
    %c0_3 = arith.constant 0 : index
    %2 = vector.load %arg1[%c0_1, %c0_2, %c0_3] : memref<1x4x256xf32, #tpu.memory_space<vmem>>, vector<1x4x256xf32>
    %3 = vector.shape_cast %2 : vector<1x4x256xf32> to vector<4x256xf32>
    %c0_4 = arith.constant 0 : index
    %c34 = arith.constant 34 : index
    %4 = vector.load %arg16[%c0_4, %c34] : memref<4x384xf32, #tpu.memory_space<vmem>>, vector<4x256xf32>
    tpu.vector_store %arg16[%c0_4, %c34], %3 {strides = array<i32>} : memref<4x384xf32, #tpu.memory_space<vmem>>, vector<4x256xf32>,
    %c0_5 = arith.constant 0 : index
    %c0_6 = arith.constant 0 : index
    %5 = vector.load %arg16[%c0_5, %c0_6] : memref<4x384xf32, #tpu.memory_space<vmem>>, vector<4x384xf32>
    %c0_7 = arith.constant 0 : index
    %c0_8 = arith.constant 0 : index
    %6 = vector.load %arg2[%c0_7, %c0_8] : memref<5x256xf32, #tpu.memory_space<vmem>>, vector<5x256xf32>
    %7 = tpu.iota {dimensions = array<i32: 1>} : vector<1x384xi32>
    %c34_i32 = arith.constant 34 : i32
    %8 = vector.broadcast %c34_i32 : i32 to vector<1x384xi32>
    %9 = arith.cmpi sge, %7, %8 : vector<1x384xi32>
    %c290_i32 = arith.constant 290 : i32
    %10 = vector.broadcast %c290_i32 : i32 to vector<1x384xi32>
    %11 = arith.cmpi slt, %7, %10 : vector<1x384xi32>
    %12 = arith.andi %9, %11 : vector<1x384xi1>
    %13 = vector.extract_strided_slice %5 {offsets = [0, 34], sizes = [4, 256], strides = [1, 1]} : vector<4x384xf32> to vector<4x256xf32>
    %c0_9 = arith.constant 0 : index
    %c0_10 = arith.constant 0 : index
    %14 = vector.load %arg3[%c0_9, %c0_10] : memref<8x4xf32, #tpu.memory_space<vmem>>, vector<8x4xf32>
    %cst_11 = arith.constant dense<0.000000e+00> : vector<8x256xf32>
    %15 = tpu.matmul %14, %13, %cst_11 {dimension_numbers = #tpu.dot_dimension_numbers<[1], [0], [0], [1], [0, 0, 1, 1], [], []>} : vector<8x4xf32>, vector<4x256xf32>, vector<8x256xf32> -> vector<8x256xf32>
    %c0_12 = arith.constant 0 : index
    %c0_13 = arith.constant 0 : index
    %16 = vector.load %arg4[%c0_12, %c0_13] : memref<8x1xf32, #tpu.memory_space<vmem>>, vector<8x1xf32>
    %17 = vector.broadcast %16 : vector<8x1xf32> to vector<8x256xf32>
    %18 = arith.addf %15, %17 : vector<8x256xf32>
    %cst_14 = arith.constant 0.000000e+00 : f32
    %19 = vector.broadcast %cst_14 : f32 to vector<8x256xf32>
    %20 = arith.maximumf %18, %19 : vector<8x256xf32>
    %c0_15 = arith.constant 0 : index
    %c0_16 = arith.constant 0 : index
    %21 = vector.load %arg5[%c0_15, %c0_16] : memref<4x4xf32, #tpu.memory_space<vmem>>, vector<4x4xf32>
    %cst_17 = arith.constant dense<0.000000e+00> : vector<4x384xf32>
    %22 = tpu.matmul %21, %5, %cst_17 {dimension_numbers = #tpu.dot_dimension_numbers<[1], [0], [0], [1], [0, 0, 1, 1], [], []>} : vector<4x4xf32>, vector<4x384xf32>, vector<4x384xf32> -> vector<4x384xf32>
    %c0_18 = arith.constant 0 : index
    %c0_19 = arith.constant 0 : index
    %23 = vector.load %arg6[%c0_18, %c0_19] : memref<4x1xf32, #tpu.memory_space<vmem>>, vector<4x1xf32>
    %24 = vector.broadcast %23 : vector<4x1xf32> to vector<4x384xf32>
    %25 = arith.addf %22, %24 : vector<4x384xf32>
    %cst_20 = arith.constant 0.000000e+00 : f32
    %26 = vector.broadcast %cst_20 : f32 to vector<4x384xf32>
    %27 = arith.maximumf %25, %26 : vector<4x384xf32>
    %cst_21 = arith.constant 0.000000e+00 : f32
    %28 = vector.shape_cast %12 : vector<1x384xi1> to vector<1x384xi1>
    %29 = vector.broadcast %28 : vector<1x384xi1> to vector<4x384xi1>
    %30 = vector.broadcast %cst_21 : f32 to vector<4x384xf32>
    %31 = arith.select %29, %27, %30 : vector<4x384xi1>, vector<4x384xf32>
    %32 = vector.extract_strided_slice %31 {offsets = [0, 17], sizes = [4, 256], strides = [1, 1]} : vector<4x384xf32> to vector<4x256xf32>
    %33 = vector.extract_strided_slice %6 {offsets = [1, 0], sizes = [1, 256], strides = [1, 1]} : vector<5x256xf32> to vector<1x256xf32>
    %34 = vector.broadcast %33 : vector<1x256xf32> to vector<4x256xf32>
    %35 = arith.mulf %32, %34 : vector<4x256xf32>
    %c0_22 = arith.constant 0 : index
    %c0_23 = arith.constant 0 : index
    %36 = vector.load %arg17[%c0_22, %c0_23] : memref<100x256xf32, #tpu.memory_space<vmem>>, vector<4x256xf32>
    tpu.vector_store %arg17[%c0_22, %c0_23], %35 {strides = array<i32>} : memref<100x256xf32, #tpu.memory_space<vmem>>, vector<4x256xf32>,
    %37 = vector.extract_strided_slice %31 {offsets = [0, 18], sizes = [4, 256], strides = [1, 1]} : vector<4x384xf32> to vector<4x256xf32>
    %c4 = arith.constant 4 : index
    %c0_24 = arith.constant 0 : index
    %38 = vector.load %arg17[%c4, %c0_24] : memref<100x256xf32, #tpu.memory_space<vmem>>, vector<4x256xf32>
    tpu.vector_store %arg17[%c4, %c0_24], %37 {strides = array<i32>} : memref<100x256xf32, #tpu.memory_space<vmem>>, vector<4x256xf32>,
    %39 = vector.extract_strided_slice %31 {offsets = [0, 19], sizes = [4, 256], strides = [1, 1]} : vector<4x384xf32> to vector<4x256xf32>
    %40 = vector.extract_strided_slice %6 {offsets = [3, 0], sizes = [1, 256], strides = [1, 1]} : vector<5x256xf32> to vector<1x256xf32>
    %41 = vector.broadcast %40 : vector<1x256xf32> to vector<4x256xf32>
    %42 = arith.mulf %39, %41 : vector<4x256xf32>
    %c8 = arith.constant 8 : index
    %c0_25 = arith.constant 0 : index
    %43 = vector.load %arg17[%c8, %c0_25] : memref<100x256xf32, #tpu.memory_space<vmem>>, vector<4x256xf32>
    tpu.vector_store %arg17[%c8, %c0_25], %42 {strides = array<i32>} : memref<100x256xf32, #tpu.memory_space<vmem>>, vector<4x256xf32>,
    %44 = vector.extract_strided_slice %31 {offsets = [0, 33], sizes = [4, 256], strides = [1, 1]} : vector<4x384xf32> to vector<4x256xf32>
    %45 = vector.extract_strided_slice %6 {offsets = [1, 0], sizes = [1, 256], strides = [1, 1]} : vector<5x256xf32> to vector<1x256xf32>
    %46 = vector.broadcast %45 : vector<1x256xf32> to vector<4x256xf32>
    %47 = arith.mulf %44, %46 : vector<4x256xf32>
    %c12 = arith.constant 12 : index
    %c0_26 = arith.constant 0 : index
    %48 = vector.load %arg17[%c12, %c0_26] : memref<100x256xf32, #tpu.memory_space<vmem>>, vector<4x256xf32>
    tpu.vector_store %arg17[%c12, %c0_26], %47 {strides = array<i32>} : memref<100x256xf32, #tpu.memory_space<vmem>>, vector<4x256xf32>,
    %49 = vector.extract_strided_slice %31 {offsets = [0, 34], sizes = [4, 256], strides = [1, 1]} : vector<4x384xf32> to vector<4x256xf32>
    %c16 = arith.constant 16 : index
    %c0_27 = arith.constant 0 : index
    %50 = vector.load %arg17[%c16, %c0_27] : memref<100x256xf32, #tpu.memory_space<vmem>>, vector<4x256xf32>
    tpu.vector_store %arg17[%c16, %c0_27], %49 {strides = array<i32>} : memref<100x256xf32, #tpu.memory_space<vmem>>, vector<4x256xf32>,
    %51 = vector.extract_strided_slice %31 {offsets = [0, 35], sizes = [4, 256], strides = [1, 1]} : vector<4x384xf32> to vector<4x256xf32>
    %52 = vector.extract_strided_slice %6 {offsets = [3, 0], sizes = [1, 256], strides = [1, 1]} : vector<5x256xf32> to vector<1x256xf32>
    %53 = vector.broadcast %52 : vector<1x256xf32> to vector<4x256xf32>
    %54 = arith.mulf %51, %53 : vector<4x256xf32>
    %c20 = arith.constant 20 : index
    %c0_28 = arith.constant 0 : index
    %55 = vector.load %arg17[%c20, %c0_28] : memref<100x256xf32, #tpu.memory_space<vmem>>, vector<4x256xf32>
    tpu.vector_store %arg17[%c20, %c0_28], %54 {strides = array<i32>} : memref<100x256xf32, #tpu.memory_space<vmem>>, vector<4x256xf32>,
    %56 = vector.extract_strided_slice %31 {offsets = [0, 49], sizes = [4, 256], strides = [1, 1]} : vector<4x384xf32> to vector<4x256xf32>
    %57 = vector.extract_strided_slice %6 {offsets = [1, 0], sizes = [1, 256], strides = [1, 1]} : vector<5x256xf32> to vector<1x256xf32>
    %58 = vector.broadcast %57 : vector<1x256xf32> to vector<4x256xf32>
    %59 = arith.mulf %56, %58 : vector<4x256xf32>
    %c24 = arith.constant 24 : index
    %c0_29 = arith.constant 0 : index
    %60 = vector.load %arg17[%c24, %c0_29] : memref<100x256xf32, #tpu.memory_space<vmem>>, vector<4x256xf32>
    tpu.vector_store %arg17[%c24, %c0_29], %59 {strides = array<i32>} : memref<100x256xf32, #tpu.memory_space<vmem>>, vector<4x256xf32>,
    %61 = vector.extract_strided_slice %31 {offsets = [0, 50], sizes = [4, 256], strides = [1, 1]} : vector<4x384xf32> to vector<4x256xf32>
    %c28 = arith.constant 28 : index
    %c0_30 = arith.constant 0 : index
    %62 = vector.load %arg17[%c28, %c0_30] : memref<100x256xf32, #tpu.memory_space<vmem>>, vector<4x256xf32>
    tpu.vector_store %arg17[%c28, %c0_30], %61 {strides = array<i32>} : memref<100x256xf32, #tpu.memory_space<vmem>>, vector<4x256xf32>,
    %63 = vector.extract_strided_slice %31 {offsets = [0, 51], sizes = [4, 256], strides = [1, 1]} : vector<4x384xf32> to vector<4x256xf32>
    %64 = vector.extract_strided_slice %6 {offsets = [3, 0], sizes = [1, 256], strides = [1, 1]} : vector<5x256xf32> to vector<1x256xf32>
    %65 = vector.broadcast %64 : vector<1x256xf32> to vector<4x256xf32>
    %66 = arith.mulf %63, %65 : vector<4x256xf32>
    %c32 = arith.constant 32 : index
    %c0_31 = arith.constant 0 : index
    %67 = vector.load %arg17[%c32, %c0_31] : memref<100x256xf32, #tpu.memory_space<vmem>>, vector<4x256xf32>
    tpu.vector_store %arg17[%c32, %c0_31], %66 {strides = array<i32>} : memref<100x256xf32, #tpu.memory_space<vmem>>, vector<4x256xf32>,
    %c0_32 = arith.constant 0 : index
    %c0_33 = arith.constant 0 : index
    %68 = vector.load %arg7[%c0_32, %c0_33] : memref<16x36xf32, #tpu.memory_space<vmem>>, vector<16x36xf32>
    %c0_34 = arith.constant 0 : index
    %c0_35 = arith.constant 0 : index
    %69 = vector.load %arg17[%c0_34, %c0_35] : memref<100x256xf32, #tpu.memory_space<vmem>>, vector<36x256xf32>
    %cst_36 = arith.constant dense<0.000000e+00> : vector<16x256xf32>
    %70 = tpu.matmul %68, %69, %cst_36 {dimension_numbers = #tpu.dot_dimension_numbers<[1], [0], [0], [1], [0, 0, 1, 1], [], []>} : vector<16x36xf32>, vector<36x256xf32>, vector<16x256xf32> -> vector<16x256xf32>
    %c0_37 = arith.constant 0 : index
    %c0_38 = arith.constant 0 : index
    %71 = vector.load %arg8[%c0_37, %c0_38] : memref<16x1xf32, #tpu.memory_space<vmem>>, vector<16x1xf32>
    %72 = vector.broadcast %71 : vector<16x1xf32> to vector<16x256xf32>
    %73 = arith.addf %70, %72 : vector<16x256xf32>
    %cst_39 = arith.constant 0.000000e+00 : f32
    %74 = vector.broadcast %cst_39 : f32 to vector<16x256xf32>
    %75 = arith.maximumf %73, %74 : vector<16x256xf32>
    %c0_40 = arith.constant 0 : index
    %c0_41 = arith.constant 0 : index
    %76 = vector.load %arg9[%c0_40, %c0_41] : memref<4x4xf32, #tpu.memory_space<vmem>>, vector<4x4xf32>
    %cst_42 = arith.constant dense<0.000000e+00> : vector<4x384xf32>
    %77 = tpu.matmul %76, %5, %cst_42 {dimension_numbers = #tpu.dot_dimension_numbers<[1], [0], [0], [1], [0, 0, 1, 1], [], []>} : vector<4x4xf32>, vector<4x384xf32>, vector<4x384xf32> -> vector<4x384xf32>
    %c0_43 = arith.constant 0 : index
    %c0_44 = arith.constant 0 : index
    %78 = vector.load %arg10[%c0_43, %c0_44] : memref<4x1xf32, #tpu.memory_space<vmem>>, vector<4x1xf32>
    %79 = vector.broadcast %78 : vector<4x1xf32> to vector<4x384xf32>
    %80 = arith.addf %77, %79 : vector<4x384xf32>
    %cst_45 = arith.constant 0.000000e+00 : f32
    %81 = vector.broadcast %cst_45 : f32 to vector<4x384xf32>
    %82 = arith.maximumf %80, %81 : vector<4x384xf32>
    %cst_46 = arith.constant 0.000000e+00 : f32
    %83 = vector.shape_cast %12 : vector<1x384xi1> to vector<1x384xi1>
    %84 = vector.broadcast %83 : vector<1x384xi1> to vector<4x384xi1>
    %85 = vector.broadcast %cst_46 : f32 to vector<4x384xf32>
    %86 = arith.select %84, %82, %85 : vector<4x384xi1>, vector<4x384xf32>
    %87 = vector.extract_strided_slice %86 {offsets = [0, 0], sizes = [4, 256], strides = [1, 1]} : vector<4x384xf32> to vector<4x256xf32>
    %88 = vector.extract_strided_slice %6 {offsets = [0, 0], sizes = [1, 256], strides = [1, 1]} : vector<5x256xf32> to vector<1x256xf32>
    %89 = vector.broadcast %88 : vector<1x256xf32> to vector<4x256xf32>
    %90 = arith.mulf %87, %89 : vector<4x256xf32>
    %c0_47 = arith.constant 0 : index
    %c0_48 = arith.constant 0 : index
    %91 = vector.load %arg17[%c0_47, %c0_48] : memref<100x256xf32, #tpu.memory_space<vmem>>, vector<4x256xf32>
    tpu.vector_store %arg17[%c0_47, %c0_48], %90 {strides = array<i32>} : memref<100x256xf32, #tpu.memory_space<vmem>>, vector<4x256xf32>,
    %92 = vector.extract_strided_slice %86 {offsets = [0, 1], sizes = [4, 256], strides = [1, 1]} : vector<4x384xf32> to vector<4x256xf32>
    %93 = vector.extract_strided_slice %6 {offsets = [1, 0], sizes = [1, 256], strides = [1, 1]} : vector<5x256xf32> to vector<1x256xf32>
    %94 = vector.broadcast %93 : vector<1x256xf32> to vector<4x256xf32>
    %95 = arith.mulf %92, %94 : vector<4x256xf32>
    %c4_49 = arith.constant 4 : index
    %c0_50 = arith.constant 0 : index
    %96 = vector.load %arg17[%c4_49, %c0_50] : memref<100x256xf32, #tpu.memory_space<vmem>>, vector<4x256xf32>
    tpu.vector_store %arg17[%c4_49, %c0_50], %95 {strides = array<i32>} : memref<100x256xf32, #tpu.memory_space<vmem>>, vector<4x256xf32>,
    %97 = vector.extract_strided_slice %86 {offsets = [0, 2], sizes = [4, 256], strides = [1, 1]} : vector<4x384xf32> to vector<4x256xf32>
    %c8_51 = arith.constant 8 : index
    %c0_52 = arith.constant 0 : index
    %98 = vector.load %arg17[%c8_51, %c0_52] : memref<100x256xf32, #tpu.memory_space<vmem>>, vector<4x256xf32>
    tpu.vector_store %arg17[%c8_51, %c0_52], %97 {strides = array<i32>} : memref<100x256xf32, #tpu.memory_space<vmem>>, vector<4x256xf32>,
    %99 = vector.extract_strided_slice %86 {offsets = [0, 3], sizes = [4, 256], strides = [1, 1]} : vector<4x384xf32> to vector<4x256xf32>
    %100 = vector.extract_strided_slice %6 {offsets = [3, 0], sizes = [1, 256], strides = [1, 1]} : vector<5x256xf32> to vector<1x256xf32>
    %101 = vector.broadcast %100 : vector<1x256xf32> to vector<4x256xf32>
    %102 = arith.mulf %99, %101 : vector<4x256xf32>
    %c12_53 = arith.constant 12 : index
    %c0_54 = arith.constant 0 : index
    %103 = vector.load %arg17[%c12_53, %c0_54] : memref<100x256xf32, #tpu.memory_space<vmem>>, vector<4x256xf32>
    tpu.vector_store %arg17[%c12_53, %c0_54], %102 {strides = array<i32>} : memref<100x256xf32, #tpu.memory_space<vmem>>, vector<4x256xf32>,
    %104 = vector.extract_strided_slice %86 {offsets = [0, 4], sizes = [4, 256], strides = [1, 1]} : vector<4x384xf32> to vector<4x256xf32>
    %105 = vector.extract_strided_slice %6 {offsets = [4, 0], sizes = [1, 256], strides = [1, 1]} : vector<5x256xf32> to vector<1x256xf32>
    %106 = vector.broadcast %105 : vector<1x256xf32> to vector<4x256xf32>
    %107 = arith.mulf %104, %106 : vector<4x256xf32>
    %c16_55 = arith.constant 16 : index
    %c0_56 = arith.constant 0 : index
    %108 = vector.load %arg17[%c16_55, %c0_56] : memref<100x256xf32, #tpu.memory_space<vmem>>, vector<4x256xf32>
    tpu.vector_store %arg17[%c16_55, %c0_56], %107 {strides = array<i32>} : memref<100x256xf32, #tpu.memory_space<vmem>>, vector<4x256xf32>,
    %109 = vector.extract_strided_slice %86 {offsets = [0, 16], sizes = [4, 256], strides = [1, 1]} : vector<4x384xf32> to vector<4x256xf32>
    %110 = vector.extract_strided_slice %6 {offsets = [0, 0], sizes = [1, 256], strides = [1, 1]} : vector<5x256xf32> to vector<1x256xf32>
    %111 = vector.broadcast %110 : vector<1x256xf32> to vector<4x256xf32>
    %112 = arith.mulf %109, %111 : vector<4x256xf32>
    %c20_57 = arith.constant 20 : index
    %c0_58 = arith.constant 0 : index
    %113 = vector.load %arg17[%c20_57, %c0_58] : memref<100x256xf32, #tpu.memory_space<vmem>>, vector<4x256xf32>
    tpu.vector_store %arg17[%c20_57, %c0_58], %112 {strides = array<i32>} : memref<100x256xf32, #tpu.memory_space<vmem>>, vector<4x256xf32>,
    %114 = vector.extract_strided_slice %86 {offsets = [0, 17], sizes = [4, 256], strides = [1, 1]} : vector<4x384xf32> to vector<4x256xf32>
    %115 = vector.extract_strided_slice %6 {offsets = [1, 0], sizes = [1, 256], strides = [1, 1]} : vector<5x256xf32> to vector<1x256xf32>
    %116 = vector.broadcast %115 : vector<1x256xf32> to vector<4x256xf32>
    %117 = arith.mulf %114, %116 : vector<4x256xf32>
    %c24_59 = arith.constant 24 : index
    %c0_60 = arith.constant 0 : index
    %118 = vector.load %arg17[%c24_59, %c0_60] : memref<100x256xf32, #tpu.memory_space<vmem>>, vector<4x256xf32>
    tpu.vector_store %arg17[%c24_59, %c0_60], %117 {strides = array<i32>} : memref<100x256xf32, #tpu.memory_space<vmem>>, vector<4x256xf32>,
    %119 = vector.extract_strided_slice %86 {offsets = [0, 18], sizes = [4, 256], strides = [1, 1]} : vector<4x384xf32> to vector<4x256xf32>
    %c28_61 = arith.constant 28 : index
    %c0_62 = arith.constant 0 : index
    %120 = vector.load %arg17[%c28_61, %c0_62] : memref<100x256xf32, #tpu.memory_space<vmem>>, vector<4x256xf32>
    tpu.vector_store %arg17[%c28_61, %c0_62], %119 {strides = array<i32>} : memref<100x256xf32, #tpu.memory_space<vmem>>, vector<4x256xf32>,
    %121 = vector.extract_strided_slice %86 {offsets = [0, 19], sizes = [4, 256], strides = [1, 1]} : vector<4x384xf32> to vector<4x256xf32>
    %122 = vector.extract_strided_slice %6 {offsets = [3, 0], sizes = [1, 256], strides = [1, 1]} : vector<5x256xf32> to vector<1x256xf32>
    %123 = vector.broadcast %122 : vector<1x256xf32> to vector<4x256xf32>
    %124 = arith.mulf %121, %123 : vector<4x256xf32>
    %c32_63 = arith.constant 32 : index
    %c0_64 = arith.constant 0 : index
    %125 = vector.load %arg17[%c32_63, %c0_64] : memref<100x256xf32, #tpu.memory_space<vmem>>, vector<4x256xf32>
    tpu.vector_store %arg17[%c32_63, %c0_64], %124 {strides = array<i32>} : memref<100x256xf32, #tpu.memory_space<vmem>>, vector<4x256xf32>,
    %126 = vector.extract_strided_slice %86 {offsets = [0, 20], sizes = [4, 256], strides = [1, 1]} : vector<4x384xf32> to vector<4x256xf32>
    %127 = vector.extract_strided_slice %6 {offsets = [4, 0], sizes = [1, 256], strides = [1, 1]} : vector<5x256xf32> to vector<1x256xf32>
    %128 = vector.broadcast %127 : vector<1x256xf32> to vector<4x256xf32>
    %129 = arith.mulf %126, %128 : vector<4x256xf32>
    %c36 = arith.constant 36 : index
    %c0_65 = arith.constant 0 : index
    %130 = vector.load %arg17[%c36, %c0_65] : memref<100x256xf32, #tpu.memory_space<vmem>>, vector<4x256xf32>
    tpu.vector_store %arg17[%c36, %c0_65], %129 {strides = array<i32>} : memref<100x256xf32, #tpu.memory_space<vmem>>, vector<4x256xf32>,
    %131 = vector.extract_strided_slice %86 {offsets = [0, 32], sizes = [4, 256], strides = [1, 1]} : vector<4x384xf32> to vector<4x256xf32>
    %132 = vector.extract_strided_slice %6 {offsets = [0, 0], sizes = [1, 256], strides = [1, 1]} : vector<5x256xf32> to vector<1x256xf32>
    %133 = vector.broadcast %132 : vector<1x256xf32> to vector<4x256xf32>
    %134 = arith.mulf %131, %133 : vector<4x256xf32>
    %c40 = arith.constant 40 : index
    %c0_66 = arith.constant 0 : index
    %135 = vector.load %arg17[%c40, %c0_66] : memref<100x256xf32, #tpu.memory_space<vmem>>, vector<4x256xf32>
    tpu.vector_store %arg17[%c40, %c0_66], %134 {strides = array<i32>} : memref<100x256xf32, #tpu.memory_space<vmem>>, vector<4x256xf32>,
    %136 = vector.extract_strided_slice %86 {offsets = [0, 33], sizes = [4, 256], strides = [1, 1]} : vector<4x384xf32> to vector<4x256xf32>
    %137 = vector.extract_strided_slice %6 {offsets = [1, 0], sizes = [1, 256], strides = [1, 1]} : vector<5x256xf32> to vector<1x256xf32>
    %138 = vector.broadcast %137 : vector<1x256xf32> to vector<4x256xf32>
    %139 = arith.mulf %136, %138 : vector<4x256xf32>
    %c44 = arith.constant 44 : index
    %c0_67 = arith.constant 0 : index
    %140 = vector.load %arg17[%c44, %c0_67] : memref<100x256xf32, #tpu.memory_space<vmem>>, vector<4x256xf32>
    tpu.vector_store %arg17[%c44, %c0_67], %139 {strides = array<i32>} : memref<100x256xf32, #tpu.memory_space<vmem>>, vector<4x256xf32>,
    %141 = vector.extract_strided_slice %86 {offsets = [0, 34], sizes = [4, 256], strides = [1, 1]} : vector<4x384xf32> to vector<4x256xf32>
    %c48 = arith.constant 48 : index
    %c0_68 = arith.constant 0 : index
    %142 = vector.load %arg17[%c48, %c0_68] : memref<100x256xf32, #tpu.memory_space<vmem>>, vector<4x256xf32>
    tpu.vector_store %arg17[%c48, %c0_68], %141 {strides = array<i32>} : memref<100x256xf32, #tpu.memory_space<vmem>>, vector<4x256xf32>,
    %143 = vector.extract_strided_slice %86 {offsets = [0, 35], sizes = [4, 256], strides = [1, 1]} : vector<4x384xf32> to vector<4x256xf32>
    %144 = vector.extract_strided_slice %6 {offsets = [3, 0], sizes = [1, 256], strides = [1, 1]} : vector<5x256xf32> to vector<1x256xf32>
    %145 = vector.broadcast %144 : vector<1x256xf32> to vector<4x256xf32>
    %146 = arith.mulf %143, %145 : vector<4x256xf32>
    %c52 = arith.constant 52 : index
    %c0_69 = arith.constant 0 : index
    %147 = vector.load %arg17[%c52, %c0_69] : memref<100x256xf32, #tpu.memory_space<vmem>>, vector<4x256xf32>
    tpu.vector_store %arg17[%c52, %c0_69], %146 {strides = array<i32>} : memref<100x256xf32, #tpu.memory_space<vmem>>, vector<4x256xf32>,
    %148 = vector.extract_strided_slice %86 {offsets = [0, 36], sizes = [4, 256], strides = [1, 1]} : vector<4x384xf32> to vector<4x256xf32>
    %149 = vector.extract_strided_slice %6 {offsets = [4, 0], sizes = [1, 256], strides = [1, 1]} : vector<5x256xf32> to vector<1x256xf32>
    %150 = vector.broadcast %149 : vector<1x256xf32> to vector<4x256xf32>
    %151 = arith.mulf %148, %150 : vector<4x256xf32>
    %c56 = arith.constant 56 : index
    %c0_70 = arith.constant 0 : index
    %152 = vector.load %arg17[%c56, %c0_70] : memref<100x256xf32, #tpu.memory_space<vmem>>, vector<4x256xf32>
    tpu.vector_store %arg17[%c56, %c0_70], %151 {strides = array<i32>} : memref<100x256xf32, #tpu.memory_space<vmem>>, vector<4x256xf32>,
    %153 = vector.extract_strided_slice %86 {offsets = [0, 48], sizes = [4, 256], strides = [1, 1]} : vector<4x384xf32> to vector<4x256xf32>
    %154 = vector.extract_strided_slice %6 {offsets = [0, 0], sizes = [1, 256], strides = [1, 1]} : vector<5x256xf32> to vector<1x256xf32>
    %155 = vector.broadcast %154 : vector<1x256xf32> to vector<4x256xf32>
    %156 = arith.mulf %153, %155 : vector<4x256xf32>
    %c60 = arith.constant 60 : index
    %c0_71 = arith.constant 0 : index
    %157 = vector.load %arg17[%c60, %c0_71] : memref<100x256xf32, #tpu.memory_space<vmem>>, vector<4x256xf32>
    tpu.vector_store %arg17[%c60, %c0_71], %156 {strides = array<i32>} : memref<100x256xf32, #tpu.memory_space<vmem>>, vector<4x256xf32>,
    %158 = vector.extract_strided_slice %86 {offsets = [0, 49], sizes = [4, 256], strides = [1, 1]} : vector<4x384xf32> to vector<4x256xf32>
    %159 = vector.extract_strided_slice %6 {offsets = [1, 0], sizes = [1, 256], strides = [1, 1]} : vector<5x256xf32> to vector<1x256xf32>
    %160 = vector.broadcast %159 : vector<1x256xf32> to vector<4x256xf32>
    %161 = arith.mulf %158, %160 : vector<4x256xf32>
    %c64 = arith.constant 64 : index
    %c0_72 = arith.constant 0 : index
    %162 = vector.load %arg17[%c64, %c0_72] : memref<100x256xf32, #tpu.memory_space<vmem>>, vector<4x256xf32>
    tpu.vector_store %arg17[%c64, %c0_72], %161 {strides = array<i32>} : memref<100x256xf32, #tpu.memory_space<vmem>>, vector<4x256xf32>,
    %163 = vector.extract_strided_slice %86 {offsets = [0, 50], sizes = [4, 256], strides = [1, 1]} : vector<4x384xf32> to vector<4x256xf32>
    %c68 = arith.constant 68 : index
    %c0_73 = arith.constant 0 : index
    %164 = vector.load %arg17[%c68, %c0_73] : memref<100x256xf32, #tpu.memory_space<vmem>>, vector<4x256xf32>
    tpu.vector_store %arg17[%c68, %c0_73], %163 {strides = array<i32>} : memref<100x256xf32, #tpu.memory_space<vmem>>, vector<4x256xf32>,
    %165 = vector.extract_strided_slice %86 {offsets = [0, 51], sizes = [4, 256], strides = [1, 1]} : vector<4x384xf32> to vector<4x256xf32>
    %166 = vector.extract_strided_slice %6 {offsets = [3, 0], sizes = [1, 256], strides = [1, 1]} : vector<5x256xf32> to vector<1x256xf32>
    %167 = vector.broadcast %166 : vector<1x256xf32> to vector<4x256xf32>
    %168 = arith.mulf %165, %167 : vector<4x256xf32>
    %c72 = arith.constant 72 : index
    %c0_74 = arith.constant 0 : index
    %169 = vector.load %arg17[%c72, %c0_74] : memref<100x256xf32, #tpu.memory_space<vmem>>, vector<4x256xf32>
    tpu.vector_store %arg17[%c72, %c0_74], %168 {strides = array<i32>} : memref<100x256xf32, #tpu.memory_space<vmem>>, vector<4x256xf32>,
    %170 = vector.extract_strided_slice %86 {offsets = [0, 52], sizes = [4, 256], strides = [1, 1]} : vector<4x384xf32> to vector<4x256xf32>
    %171 = vector.extract_strided_slice %6 {offsets = [4, 0], sizes = [1, 256], strides = [1, 1]} : vector<5x256xf32> to vector<1x256xf32>
    %172 = vector.broadcast %171 : vector<1x256xf32> to vector<4x256xf32>
    %173 = arith.mulf %170, %172 : vector<4x256xf32>
    %c76 = arith.constant 76 : index
    %c0_75 = arith.constant 0 : index
    %174 = vector.load %arg17[%c76, %c0_75] : memref<100x256xf32, #tpu.memory_space<vmem>>, vector<4x256xf32>
    tpu.vector_store %arg17[%c76, %c0_75], %173 {strides = array<i32>} : memref<100x256xf32, #tpu.memory_space<vmem>>, vector<4x256xf32>,
    %175 = vector.extract_strided_slice %86 {offsets = [0, 64], sizes = [4, 256], strides = [1, 1]} : vector<4x384xf32> to vector<4x256xf32>
    %176 = vector.extract_strided_slice %6 {offsets = [0, 0], sizes = [1, 256], strides = [1, 1]} : vector<5x256xf32> to vector<1x256xf32>
    %177 = vector.broadcast %176 : vector<1x256xf32> to vector<4x256xf32>
    %178 = arith.mulf %175, %177 : vector<4x256xf32>
    %c80 = arith.constant 80 : index
    %c0_76 = arith.constant 0 : index
    %179 = vector.load %arg17[%c80, %c0_76] : memref<100x256xf32, #tpu.memory_space<vmem>>, vector<4x256xf32>
    tpu.vector_store %arg17[%c80, %c0_76], %178 {strides = array<i32>} : memref<100x256xf32, #tpu.memory_space<vmem>>, vector<4x256xf32>,
    %180 = vector.extract_strided_slice %86 {offsets = [0, 65], sizes = [4, 256], strides = [1, 1]} : vector<4x384xf32> to vector<4x256xf32>
    %181 = vector.extract_strided_slice %6 {offsets = [1, 0], sizes = [1, 256], strides = [1, 1]} : vector<5x256xf32> to vector<1x256xf32>
    %182 = vector.broadcast %181 : vector<1x256xf32> to vector<4x256xf32>
    %183 = arith.mulf %180, %182 : vector<4x256xf32>
    %c84 = arith.constant 84 : index
    %c0_77 = arith.constant 0 : index
    %184 = vector.load %arg17[%c84, %c0_77] : memref<100x256xf32, #tpu.memory_space<vmem>>, vector<4x256xf32>
    tpu.vector_store %arg17[%c84, %c0_77], %183 {strides = array<i32>} : memref<100x256xf32, #tpu.memory_space<vmem>>, vector<4x256xf32>,
    %185 = vector.extract_strided_slice %86 {offsets = [0, 66], sizes = [4, 256], strides = [1, 1]} : vector<4x384xf32> to vector<4x256xf32>
    %c88 = arith.constant 88 : index
    %c0_78 = arith.constant 0 : index
    %186 = vector.load %arg17[%c88, %c0_78] : memref<100x256xf32, #tpu.memory_space<vmem>>, vector<4x256xf32>
    tpu.vector_store %arg17[%c88, %c0_78], %185 {strides = array<i32>} : memref<100x256xf32, #tpu.memory_space<vmem>>, vector<4x256xf32>,
    %187 = vector.extract_strided_slice %86 {offsets = [0, 67], sizes = [4, 256], strides = [1, 1]} : vector<4x384xf32> to vector<4x256xf32>
    %188 = vector.extract_strided_slice %6 {offsets = [3, 0], sizes = [1, 256], strides = [1, 1]} : vector<5x256xf32> to vector<1x256xf32>
    %189 = vector.broadcast %188 : vector<1x256xf32> to vector<4x256xf32>
    %190 = arith.mulf %187, %189 : vector<4x256xf32>
    %c92 = arith.constant 92 : index
    %c0_79 = arith.constant 0 : index
    %191 = vector.load %arg17[%c92, %c0_79] : memref<100x256xf32, #tpu.memory_space<vmem>>, vector<4x256xf32>
    tpu.vector_store %arg17[%c92, %c0_79], %190 {strides = array<i32>} : memref<100x256xf32, #tpu.memory_space<vmem>>, vector<4x256xf32>,
    %192 = vector.extract_strided_slice %86 {offsets = [0, 68], sizes = [4, 256], strides = [1, 1]} : vector<4x384xf32> to vector<4x256xf32>
    %193 = vector.extract_strided_slice %6 {offsets = [4, 0], sizes = [1, 256], strides = [1, 1]} : vector<5x256xf32> to vector<1x256xf32>
    %194 = vector.broadcast %193 : vector<1x256xf32> to vector<4x256xf32>
    %195 = arith.mulf %192, %194 : vector<4x256xf32>
    %c96 = arith.constant 96 : index
    %c0_80 = arith.constant 0 : index
    %196 = vector.load %arg17[%c96, %c0_80] : memref<100x256xf32, #tpu.memory_space<vmem>>, vector<4x256xf32>
    tpu.vector_store %arg17[%c96, %c0_80], %195 {strides = array<i32>} : memref<100x256xf32, #tpu.memory_space<vmem>>, vector<4x256xf32>,
    %c0_81 = arith.constant 0 : index
    %c0_82 = arith.constant 0 : index
    %197 = vector.load %arg11[%c0_81, %c0_82] : memref<8x100xf32, #tpu.memory_space<vmem>>, vector<8x100xf32>
    %c0_83 = arith.constant 0 : index
    %c0_84 = arith.constant 0 : index
    %198 = vector.load %arg17[%c0_83, %c0_84] : memref<100x256xf32, #tpu.memory_space<vmem>>, vector<100x256xf32>
    %cst_85 = arith.constant dense<0.000000e+00> : vector<8x256xf32>
    %199 = tpu.matmul %197, %198, %cst_85 {dimension_numbers = #tpu.dot_dimension_numbers<[1], [0], [0], [1], [0, 0, 1, 1], [], []>} : vector<8x100xf32>, vector<100x256xf32>, vector<8x256xf32> -> vector<8x256xf32>
    %c0_86 = arith.constant 0 : index
    %c0_87 = arith.constant 0 : index
    %200 = vector.load %arg12[%c0_86, %c0_87] : memref<8x1xf32, #tpu.memory_space<vmem>>, vector<8x1xf32>
    %201 = vector.broadcast %200 : vector<8x1xf32> to vector<8x256xf32>
    %202 = arith.addf %199, %201 : vector<8x256xf32>
    %cst_88 = arith.constant 0.000000e+00 : f32
    %203 = vector.broadcast %cst_88 : f32 to vector<8x256xf32>
    %204 = arith.maximumf %202, %203 : vector<8x256xf32>
    %cst_89 = arith.constant -1.000000e+30 : f32
    %205 = vector.shape_cast %12 : vector<1x384xi1> to vector<1x384xi1>
    %206 = vector.broadcast %205 : vector<1x384xi1> to vector<4x384xi1>
    %207 = vector.broadcast %cst_89 : f32 to vector<4x384xf32>
    %208 = arith.select %206, %5, %207 : vector<4x384xi1>, vector<4x384xf32>
    %209 = vector.extract_strided_slice %208 {offsets = [0, 17], sizes = [4, 256], strides = [1, 1]} : vector<4x384xf32> to vector<4x256xf32>
    %210 = vector.extract_strided_slice %6 {offsets = [1, 0], sizes = [1, 256], strides = [1, 1]} : vector<5x256xf32> to vector<1x256xf32>
    %cst_90 = arith.constant 5.000000e-01 : f32
    %211 = vector.broadcast %cst_90 : f32 to vector<1x256xf32>
    %212 = arith.cmpf ogt, %210, %211 : vector<1x256xf32>
    %cst_91 = arith.constant -1.000000e+30 : f32
    %213 = vector.shape_cast %212 : vector<1x256xi1> to vector<1x256xi1>
    %214 = vector.broadcast %213 : vector<1x256xi1> to vector<4x256xi1>
    %215 = vector.broadcast %cst_91 : f32 to vector<4x256xf32>
    %216 = arith.select %214, %209, %215 : vector<4x256xi1>, vector<4x256xf32>
    %217 = vector.extract_strided_slice %208 {offsets = [0, 18], sizes = [4, 256], strides = [1, 1]} : vector<4x384xf32> to vector<4x256xf32>
    %218 = arith.maximumf %216, %217 : vector<4x256xf32>
    %219 = vector.extract_strided_slice %208 {offsets = [0, 19], sizes = [4, 256], strides = [1, 1]} : vector<4x384xf32> to vector<4x256xf32>
    %220 = vector.extract_strided_slice %6 {offsets = [3, 0], sizes = [1, 256], strides = [1, 1]} : vector<5x256xf32> to vector<1x256xf32>
    %cst_92 = arith.constant 5.000000e-01 : f32
    %221 = vector.broadcast %cst_92 : f32 to vector<1x256xf32>
    %222 = arith.cmpf ogt, %220, %221 : vector<1x256xf32>
    %cst_93 = arith.constant -1.000000e+30 : f32
    %223 = vector.shape_cast %222 : vector<1x256xi1> to vector<1x256xi1>
    %224 = vector.broadcast %223 : vector<1x256xi1> to vector<4x256xi1>
    %225 = vector.broadcast %cst_93 : f32 to vector<4x256xf32>
    %226 = arith.select %224, %219, %225 : vector<4x256xi1>, vector<4x256xf32>
    %227 = arith.maximumf %218, %226 : vector<4x256xf32>
    %228 = vector.extract_strided_slice %208 {offsets = [0, 33], sizes = [4, 256], strides = [1, 1]} : vector<4x384xf32> to vector<4x256xf32>
    %229 = vector.extract_strided_slice %6 {offsets = [1, 0], sizes = [1, 256], strides = [1, 1]} : vector<5x256xf32> to vector<1x256xf32>
    %cst_94 = arith.constant 5.000000e-01 : f32
    %230 = vector.broadcast %cst_94 : f32 to vector<1x256xf32>
    %231 = arith.cmpf ogt, %229, %230 : vector<1x256xf32>
    %cst_95 = arith.constant -1.000000e+30 : f32
    %232 = vector.shape_cast %231 : vector<1x256xi1> to vector<1x256xi1>
    %233 = vector.broadcast %232 : vector<1x256xi1> to vector<4x256xi1>
    %234 = vector.broadcast %cst_95 : f32 to vector<4x256xf32>
    %235 = arith.select %233, %228, %234 : vector<4x256xi1>, vector<4x256xf32>
    %236 = arith.maximumf %227, %235 : vector<4x256xf32>
    %237 = vector.extract_strided_slice %208 {offsets = [0, 34], sizes = [4, 256], strides = [1, 1]} : vector<4x384xf32> to vector<4x256xf32>
    %238 = arith.maximumf %236, %237 : vector<4x256xf32>
    %239 = vector.extract_strided_slice %208 {offsets = [0, 35], sizes = [4, 256], strides = [1, 1]} : vector<4x384xf32> to vector<4x256xf32>
    %240 = vector.extract_strided_slice %6 {offsets = [3, 0], sizes = [1, 256], strides = [1, 1]} : vector<5x256xf32> to vector<1x256xf32>
    %cst_96 = arith.constant 5.000000e-01 : f32
    %241 = vector.broadcast %cst_96 : f32 to vector<1x256xf32>
    %242 = arith.cmpf ogt, %240, %241 : vector<1x256xf32>
    %cst_97 = arith.constant -1.000000e+30 : f32
    %243 = vector.shape_cast %242 : vector<1x256xi1> to vector<1x256xi1>
    %244 = vector.broadcast %243 : vector<1x256xi1> to vector<4x256xi1>
    %245 = vector.broadcast %cst_97 : f32 to vector<4x256xf32>
    %246 = arith.select %244, %239, %245 : vector<4x256xi1>, vector<4x256xf32>
    %247 = arith.maximumf %238, %246 : vector<4x256xf32>
    %248 = vector.extract_strided_slice %208 {offsets = [0, 49], sizes = [4, 256], strides = [1, 1]} : vector<4x384xf32> to vector<4x256xf32>
    %249 = vector.extract_strided_slice %6 {offsets = [1, 0], sizes = [1, 256], strides = [1, 1]} : vector<5x256xf32> to vector<1x256xf32>
    %cst_98 = arith.constant 5.000000e-01 : f32
    %250 = vector.broadcast %cst_98 : f32 to vector<1x256xf32>
    %251 = arith.cmpf ogt, %249, %250 : vector<1x256xf32>
    %cst_99 = arith.constant -1.000000e+30 : f32
    %252 = vector.shape_cast %251 : vector<1x256xi1> to vector<1x256xi1>
    %253 = vector.broadcast %252 : vector<1x256xi1> to vector<4x256xi1>
    %254 = vector.broadcast %cst_99 : f32 to vector<4x256xf32>
    %255 = arith.select %253, %248, %254 : vector<4x256xi1>, vector<4x256xf32>
    %256 = arith.maximumf %247, %255 : vector<4x256xf32>
    %257 = vector.extract_strided_slice %208 {offsets = [0, 50], sizes = [4, 256], strides = [1, 1]} : vector<4x384xf32> to vector<4x256xf32>
    %258 = arith.maximumf %256, %257 : vector<4x256xf32>
    %259 = vector.extract_strided_slice %208 {offsets = [0, 51], sizes = [4, 256], strides = [1, 1]} : vector<4x384xf32> to vector<4x256xf32>
    %260 = vector.extract_strided_slice %6 {offsets = [3, 0], sizes = [1, 256], strides = [1, 1]} : vector<5x256xf32> to vector<1x256xf32>
    %cst_100 = arith.constant 5.000000e-01 : f32
    %261 = vector.broadcast %cst_100 : f32 to vector<1x256xf32>
    %262 = arith.cmpf ogt, %260, %261 : vector<1x256xf32>
    %cst_101 = arith.constant -1.000000e+30 : f32
    %263 = vector.shape_cast %262 : vector<1x256xi1> to vector<1x256xi1>
    %264 = vector.broadcast %263 : vector<1x256xi1> to vector<4x256xi1>
    %265 = vector.broadcast %cst_101 : f32 to vector<4x256xf32>
    %266 = arith.select %264, %259, %265 : vector<4x256xi1>, vector<4x256xf32>
    %267 = arith.maximumf %258, %266 : vector<4x256xf32>
    %c0_102 = arith.constant 0 : index
    %c0_103 = arith.constant 0 : index
    %268 = vector.load %arg13[%c0_102, %c0_103] : memref<8x4xf32, #tpu.memory_space<vmem>>, vector<8x4xf32>
    %cst_104 = arith.constant dense<0.000000e+00> : vector<8x256xf32>
    %269 = tpu.matmul %268, %267, %cst_104 {dimension_numbers = #tpu.dot_dimension_numbers<[1], [0], [0], [1], [0, 0, 1, 1], [], []>} : vector<8x4xf32>, vector<4x256xf32>, vector<8x256xf32> -> vector<8x256xf32>
    %c0_105 = arith.constant 0 : index
    %c0_106 = arith.constant 0 : index
    %270 = vector.load %arg14[%c0_105, %c0_106] : memref<8x1xf32, #tpu.memory_space<vmem>>, vector<8x1xf32>
    %271 = vector.broadcast %270 : vector<8x1xf32> to vector<8x256xf32>
    %272 = arith.addf %269, %271 : vector<8x256xf32>
    %cst_107 = arith.constant 0.000000e+00 : f32
    %273 = vector.broadcast %cst_107 : f32 to vector<8x256xf32>
    %274 = arith.maximumf %272, %273 : vector<8x256xf32>
    %c0_108 = arith.constant 0 : index
    %c0_109 = arith.constant 0 : index
    %c0_110 = arith.constant 0 : index
    %275 = vector.load %arg15[%c0_108, %c0_109, %c0_110] : memref<1x40x256xf32, #tpu.memory_space<vmem>>, vector<1x8x256xf32>
    %276 = vector.shape_cast %275 : vector<1x8x256xf32> to vector<8x256xf32>
    %277 = vector.shape_cast %20 : vector<8x256xf32> to vector<1x8x256xf32>
    tpu.vector_store %arg15[%c0_108, %c0_109, %c0_110], %277 {strides = array<i32>} : memref<1x40x256xf32, #tpu.memory_space<vmem>>, vector<1x8x256xf32>,
    %c0_111 = arith.constant 0 : index
    %c8_112 = arith.constant 8 : index
    %c0_113 = arith.constant 0 : index
    %278 = vector.load %arg15[%c0_111, %c8_112, %c0_113] : memref<1x40x256xf32, #tpu.memory_space<vmem>>, vector<1x16x256xf32>
    %279 = vector.shape_cast %278 : vector<1x16x256xf32> to vector<16x256xf32>
    %280 = vector.shape_cast %75 : vector<16x256xf32> to vector<1x16x256xf32>
    tpu.vector_store %arg15[%c0_111, %c8_112, %c0_113], %280 {strides = array<i32>} : memref<1x40x256xf32, #tpu.memory_space<vmem>>, vector<1x16x256xf32>,
    %c0_114 = arith.constant 0 : index
    %c24_115 = arith.constant 24 : index
    %c0_116 = arith.constant 0 : index
    %281 = vector.load %arg15[%c0_114, %c24_115, %c0_116] : memref<1x40x256xf32, #tpu.memory_space<vmem>>, vector<1x8x256xf32>
    %282 = vector.shape_cast %281 : vector<1x8x256xf32> to vector<8x256xf32>
    %283 = vector.shape_cast %204 : vector<8x256xf32> to vector<1x8x256xf32>
    tpu.vector_store %arg15[%c0_114, %c24_115, %c0_116], %283 {strides = array<i32>} : memref<1x40x256xf32, #tpu.memory_space<vmem>>, vector<1x8x256xf32>,
    %c0_117 = arith.constant 0 : index
    %c32_118 = arith.constant 32 : index
    %c0_119 = arith.constant 0 : index
    %284 = vector.load %arg15[%c0_117, %c32_118, %c0_119] : memref<1x40x256xf32, #tpu.memory_space<vmem>>, vector<1x8x256xf32>
    %285 = vector.shape_cast %284 : vector<1x8x256xf32> to vector<8x256xf32>
    %286 = vector.shape_cast %274 : vector<8x256xf32> to vector<1x8x256xf32>
    tpu.vector_store %arg15[%c0_117, %c32_118, %c0_119], %286 {strides = array<i32>} : memref<1x40x256xf32, #tpu.memory_space<vmem>>, vector<1x8x256xf32>,
    return
  }
  func.func @transform_0(%arg0: i32) -> (i32, i32, i32) {
    %c0_i32 = arith.constant 0 : i32
    %c0_i32_0 = arith.constant 0 : i32
    %c0_i32_1 = arith.constant 0 : i32
    return %arg0, %c0_i32, %c0_i32_0 : i32, i32, i32
  }
  func.func @transform_1(%arg0: i32) -> (i32, i32) {
    %c0_i32 = arith.constant 0 : i32
    %c0_i32_0 = arith.constant 0 : i32
    %c0_i32_1 = arith.constant 0 : i32
    return %c0_i32, %c0_i32_0 : i32, i32
  }
  func.func @transform_2(%arg0: i32) -> (i32, i32) {
    %c0_i32 = arith.constant 0 : i32
    %c0_i32_0 = arith.constant 0 : i32
    %c0_i32_1 = arith.constant 0 : i32
    return %c0_i32, %c0_i32_0 : i32, i32
  }
  func.func @transform_3(%arg0: i32) -> (i32, i32) {
    %c0_i32 = arith.constant 0 : i32
    %c0_i32_0 = arith.constant 0 : i32
    %c0_i32_1 = arith.constant 0 : i32
    return %c0_i32, %c0_i32_0 : i32, i32
  }
  func.func @transform_4(%arg0: i32) -> (i32, i32) {
    %c0_i32 = arith.constant 0 : i32
    %c0_i32_0 = arith.constant 0 : i32
    %c0_i32_1 = arith.constant 0 : i32
    return %c0_i32, %c0_i32_0 : i32, i32
  }
  func.func @transform_5(%arg0: i32) -> (i32, i32) {
    %c0_i32 = arith.constant 0 : i32
    %c0_i32_0 = arith.constant 0 : i32
    %c0_i32_1 = arith.constant 0 : i32
    return %c0_i32, %c0_i32_0 : i32, i32
  }
  func.func @transform_6(%arg0: i32) -> (i32, i32) {
    %c0_i32 = arith.constant 0 : i32
    %c0_i32_0 = arith.constant 0 : i32
    %c0_i32_1 = arith.constant 0 : i32
    return %c0_i32, %c0_i32_0 : i32, i32
  }
  func.func @transform_7(%arg0: i32) -> (i32, i32) {
    %c0_i32 = arith.constant 0 : i32
    %c0_i32_0 = arith.constant 0 : i32
    %c0_i32_1 = arith.constant 0 : i32
    return %c0_i32, %c0_i32_0 : i32, i32
  }
  func.func @transform_8(%arg0: i32) -> (i32, i32) {
    %c0_i32 = arith.constant 0 : i32
    %c0_i32_0 = arith.constant 0 : i32
    %c0_i32_1 = arith.constant 0 : i32
    return %c0_i32, %c0_i32_0 : i32, i32
  }
  func.func @transform_9(%arg0: i32) -> (i32, i32) {
    %c0_i32 = arith.constant 0 : i32
    %c0_i32_0 = arith.constant 0 : i32
    %c0_i32_1 = arith.constant 0 : i32
    return %c0_i32, %c0_i32_0 : i32, i32
  }
  func.func @transform_10(%arg0: i32) -> (i32, i32) {
    %c0_i32 = arith.constant 0 : i32
    %c0_i32_0 = arith.constant 0 : i32
    %c0_i32_1 = arith.constant 0 : i32
    return %c0_i32, %c0_i32_0 : i32, i32
  }
  func.func @transform_11(%arg0: i32) -> (i32, i32) {
    %c0_i32 = arith.constant 0 : i32
    %c0_i32_0 = arith.constant 0 : i32
    %c0_i32_1 = arith.constant 0 : i32
    return %c0_i32, %c0_i32_0 : i32, i32
  }
  func.func @transform_12(%arg0: i32) -> (i32, i32) {
    %c0_i32 = arith.constant 0 : i32
    %c0_i32_0 = arith.constant 0 : i32
    %c0_i32_1 = arith.constant 0 : i32
    return %c0_i32, %c0_i32_0 : i32, i32
  }
  func.func @transform_13(%arg0: i32) -> (i32, i32) {
    %c0_i32 = arith.constant 0 : i32
    %c0_i32_0 = arith.constant 0 : i32
    %c0_i32_1 = arith.constant 0 : i32
    return %c0_i32, %c0_i32_0 : i32, i32
  }
  func.func @transform_14(%arg0: i32) -> (i32, i32, i32) {
    %c0_i32 = arith.constant 0 : i32
    %c0_i32_0 = arith.constant 0 : i32
    %c0_i32_1 = arith.constant 0 : i32
    return %arg0, %c0_i32, %c0_i32_0 : i32, i32, i32
  }
}

</mosaic_0001>

<llo_original>
// kernel: tpu_custom_call.1
$region0: #{tpu_custom_call.1}
  #allocation0 [shape = 'u32[]', space=smem, size = 0x4, offset = 0x4, fixed_abs, tag = 'smem constant byte address 0x4 - core index']
  #allocation1 [shape = 'u32[144,128]{1,0:T(1,128)}', space=vmem, size = 0x12000, scoped, tag = 'internal scratch']
  #allocation2 [shape = 'f32[4,384]{1,0:T(4,128)}', space=vmem, size = 0x1800, scoped, tag = 'scratch operand']
  #allocation3 [shape = 'f32[100,256]{1,0:T(8,128)}', space=vmem, size = 0x1a000, scoped, tag = 'scratch operand']
  %s0 = inlined_call_operand.vmem [shape: f32[2,4,256], index: 0, kind: input, shape index: {}]
  %s1 = inlined_call_operand.vmem [shape: f32[5,256], index: 1, kind: input, shape index: {}]
  %s2 = inlined_call_operand.vmem [shape: f32[8,4], index: 2, kind: input, shape index: {}]
  %s3 = inlined_call_operand.vmem [shape: f32[8,1], index: 3, kind: input, shape index: {}]
  %s4 = inlined_call_operand.vmem [shape: f32[4,4], index: 4, kind: input, shape index: {}]
  %s5 = inlined_call_operand.vmem [shape: f32[4,1], index: 5, kind: input, shape index: {}]
  %s6 = inlined_call_operand.vmem [shape: f32[16,36], index: 6, kind: input, shape index: {}]
  %s7 = inlined_call_operand.vmem [shape: f32[16,1], index: 7, kind: input, shape index: {}]
  %s8 = inlined_call_operand.vmem [shape: f32[4,4], index: 8, kind: input, shape index: {}]
  %s9 = inlined_call_operand.vmem [shape: f32[4,1], index: 9, kind: input, shape index: {}]
  %s10 = inlined_call_operand.vmem [shape: f32[8,100], index: 10, kind: input, shape index: {}]
  %s11 = inlined_call_operand.vmem [shape: f32[8,1], index: 11, kind: input, shape index: {}]
  %s12 = inlined_call_operand.vmem [shape: f32[8,4], index: 12, kind: input, shape index: {}]
  %s13 = inlined_call_operand.vmem [shape: f32[8,1], index: 13, kind: input, shape index: {}]
  %s14 = inlined_call_operand.hbm [shape: f32[2,40,256], index: 14, kind: output, shape index: {}]
  %s15 = sld [smem:[#allocation0]]
  $region89: #{tpu_custom_call.1} parent=0
    _
  %s17 = ssub.s32 1, %s15
  %s18 = scalar_select 0, %s17, %s15
  $region1: #{tpu_custom_call.1} parent=0
    #allocation4 [shape = 'u8[81920]{0}', space=vmem, size = 0x14000, scoped, tag = 'output window, operand 0']
    #allocation5 [shape = 's32[2]{0}', space=sflag, size = 0x8, scoped, tag = 'scoped memory for tpu_custom_call.1']
    %19 = vsyncpa [#allocation5], 0
    %s20 = scalar_lea.sflag [#allocation5], 1
    %21 = vsyncpa %s20, 0
    loop: start=0, step=1, limit=4
    $region2: #{tpu_custom_call.1} parent=1 // loop_pre_header
      _
    $region3: #{tpu_custom_call.1} parent=1 // loop_header
      %s23 = sphi 0, %s27
      %p24 = scmp.ge.s32.totalorder %s23, 4
      %s33 = sphi 0, %s35
      %s36 = sphi 0, %s33
      %s37 = sphi 0, %s36
      %s53 = sphi 0, %s37
      %s57 = sphi 0, %s57
      %s59 = sphi 0, %s57
      %s60 = sphi 0, %s59
      %s74 = sphi 0, %s60
      %s78 = sphi 0, %s78
      %s80 = sphi 0, %s78
      %s81 = sphi 0, %s80
      %s95 = sphi 0, %s81
      %s99 = sphi 0, %s99
      %s101 = sphi 0, %s99
      %s102 = sphi 0, %s101
      %s116 = sphi 0, %s102
      %s120 = sphi 0, %s120
      %s122 = sphi 0, %s120
      %s123 = sphi 0, %s122
      %s137 = sphi 0, %s123
      %s141 = sphi 0, %s141
      %s143 = sphi 0, %s141
      %s144 = sphi 0, %s143
      %s158 = sphi 0, %s144
      %s162 = sphi 0, %s162
      %s164 = sphi 0, %s162
      %s165 = sphi 0, %s164
      %s179 = sphi 0, %s165
      %s183 = sphi 0, %s183
      %s185 = sphi 0, %s183
      %s186 = sphi 0, %s185
      %s200 = sphi 0, %s186
      %s204 = sphi 0, %s204
      %s206 = sphi 0, %s204
      %s207 = sphi 0, %s206
      %s221 = sphi 0, %s207
      %s225 = sphi 0, %s225
      %s227 = sphi 0, %s225
      %s228 = sphi 0, %s227
      %s242 = sphi 0, %s228
      %s246 = sphi 0, %s246
      %s248 = sphi 0, %s246
      %s249 = sphi 0, %s248
      %s263 = sphi 0, %s249
      %s267 = sphi 0, %s267
      %s269 = sphi 0, %s267
      %s270 = sphi 0, %s269
      %s284 = sphi 0, %s270
      %s288 = sphi 0, %s288
      %s290 = sphi 0, %s288
      %s291 = sphi 0, %s290
      %s305 = sphi 0, %s291
      %s309 = sphi 0, %s309
      %s311 = sphi 0, %s309
      %s312 = sphi 0, %s311
      %s326 = sphi 0, %s312
      %s332 = sphi 0, %s334
      %s335 = sphi 0, %s332
      %s336 = sphi 0, %s335
      %s352 = sphi 0, %s336
    $region4: #{tpu_custom_call.1} parent=1 // loop_header_branch
      %26 = sbr.rel (%p24) target = $region8
    $region5: #{tpu_custom_call.1} parent=1 // loop_body
      %s28 = ssub.s32 %s23, 1
      %s29 = ssub.s32 %s23, 2
      %s30 = sadd.s32 %s23, 1
      %s31 = ssub.s32 %s23, %s30
      %p32 = scmp.eq.s32.totalorder %s31, 0
      %s34 = sadd.s32 %s33, 1
      %s35 = scalar_select %p32, %s33, %s34
      %p38 = pneg %p32
      %p39 = scmp.eq.s32.totalorder %s23, 1
      %p40 = por %p38, %p39
      %p41 = scmp.ne.s32.totalorder %s33, %s36
      %p42 = scmp.eq.s32.totalorder %s23, 0
      %p43 = por %p41, %p42
      %p44 = scmp.ne.s32.totalorder %s33, %s36
      %p45 = scmp.eq.s32.totalorder %s28, 1
      %p46 = por %p44, %p45
      %p47 = scmp.ne.s32.totalorder %s36, %s37
      %p48 = scmp.eq.s32.totalorder %s28, 0
      %p49 = por %p47, %p48
      %p50 = scmp.ne.s32.totalorder %s36, %s37
      %p51 = scmp.eq.s32.totalorder %s29, 1
      %p52 = por %p50, %p51
      %p54 = scmp.ne.s32.totalorder %s37, %s53
      %p55 = scmp.eq.s32.totalorder %s29, 0
      %p56 = por %p54, %p55
      %s58 = sadd.s32 %s57, 1
      %p61 = scmp.eq.s32.totalorder %s23, 1
      %p62 = scmp.ne.s32.totalorder %s57, %s59
      %p63 = scmp.eq.s32.totalorder %s23, 0
      %p64 = por %p62, %p63
      %p65 = scmp.ne.s32.totalorder %s57, %s59
      %p66 = scmp.eq.s32.totalorder %s28, 1
      %p67 = por %p65, %p66
      %p68 = scmp.ne.s32.totalorder %s59, %s60
      %p69 = scmp.eq.s32.totalorder %s28, 0
      %p70 = por %p68, %p69
      %p71 = scmp.ne.s32.totalorder %s59, %s60
      %p72 = scmp.eq.s32.totalorder %s29, 1
      %p73 = por %p71, %p72
      %p75 = scmp.ne.s32.totalorder %s60, %s74
      %p76 = scmp.eq.s32.totalorder %s29, 0
      %p77 = por %p75, %p76
      %s79 = sadd.s32 %s78, 1
      %p82 = scmp.eq.s32.totalorder %s23, 1
      %p83 = scmp.ne.s32.totalorder %s78, %s80
      %p84 = scmp.eq.s32.totalorder %s23, 0
      %p85 = por %p83, %p84
      %p86 = scmp.ne.s32.totalorder %s78, %s80
      %p87 = scmp.eq.s32.totalorder %s28, 1
      %p88 = por %p86, %p87
      %p89 = scmp.ne.s32.totalorder %s80, %s81
      %p90 = scmp.eq.s32.totalorder %s28, 0
      %p91 = por %p89, %p90
      %p92 = scmp.ne.s32.totalorder %s80, %s81
      %p93 = scmp.eq.s32.totalorder %s29, 1
      %p94 = por %p92, %p93
      %p96 = scmp.ne.s32.totalorder %s81, %s95
      %p97 = scmp.eq.s32.totalorder %s29, 0
      %p98 = por %p96, %p97
      %s100 = sadd.s32 %s99, 1
      %p103 = scmp.eq.s32.totalorder %s23, 1
      %p104 = scmp.ne.s32.totalorder %s99, %s101
      %p105 = scmp.eq.s32.totalorder %s23, 0
      %p106 = por %p104, %p105
      %p107 = scmp.ne.s32.totalorder %s99, %s101
      %p108 = scmp.eq.s32.totalorder %s28, 1
      %p109 = por %p107, %p108
      %p110 = scmp.ne.s32.totalorder %s101, %s102
      %p111 = scmp.eq.s32.totalorder %s28, 0
      %p112 = por %p110, %p111
      %p113 = scmp.ne.s32.totalorder %s101, %s102
      %p114 = scmp.eq.s32.totalorder %s29, 1
      %p115 = por %p113, %p114
      %p117 = scmp.ne.s32.totalorder %s102, %s116
      %p118 = scmp.eq.s32.totalorder %s29, 0
      %p119 = por %p117, %p118
      %s121 = sadd.s32 %s120, 1
      %p124 = scmp.eq.s32.totalorder %s23, 1
      %p125 = scmp.ne.s32.totalorder %s120, %s122
      %p126 = scmp.eq.s32.totalorder %s23, 0
      %p127 = por %p125, %p126
      %p128 = scmp.ne.s32.totalorder %s120, %s122
      %p129 = scmp.eq.s32.totalorder %s28, 1
      %p130 = por %p128, %p129
      %p131 = scmp.ne.s32.totalorder %s122, %s123
      %p132 = scmp.eq.s32.totalorder %s28, 0
      %p133 = por %p131, %p132
      %p134 = scmp.ne.s32.totalorder %s122, %s123
      %p135 = scmp.eq.s32.totalorder %s29, 1
      %p136 = por %p134, %p135
      %p138 = scmp.ne.s32.totalorder %s123, %s137
      %p139 = scmp.eq.s32.totalorder %s29, 0
      %p140 = por %p138, %p139
      %s142 = sadd.s32 %s141, 1
      %p145 = scmp.eq.s32.totalorder %s23, 1
      %p146 = scmp.ne.s32.totalorder %s141, %s143
      %p147 = scmp.eq.s32.totalorder %s23, 0
      %p148 = por %p146, %p147
      %p149 = scmp.ne.s32.totalorder %s141, %s143
      %p150 = scmp.eq.s32.totalorder %s28, 1
      %p151 = por %p149, %p150
      %p152 = scmp.ne.s32.totalorder %s143, %s144
      %p153 = scmp.eq.s32.totalorder %s28, 0
      %p154 = por %p152, %p153
      %p155 = scmp.ne.s32.totalorder %s143, %s144
      %p156 = scmp.eq.s32.totalorder %s29, 1
      %p157 = por %p155, %p156
      %p159 = scmp.ne.s32.totalorder %s144, %s158
      %p160 = scmp.eq.s32.totalorder %s29, 0
      %p161 = por %p159, %p160
      %s163 = sadd.s32 %s162, 1
      %p166 = scmp.eq.s32.totalorder %s23, 1
      %p167 = scmp.ne.s32.totalorder %s162, %s164
      %p168 = scmp.eq.s32.totalorder %s23, 0
      %p169 = por %p167, %p168
      %p170 = scmp.ne.s32.totalorder %s162, %s164
      %p171 = scmp.eq.s32.totalorder %s28, 1
      %p172 = por %p170, %p171
      %p173 = scmp.ne.s32.totalorder %s164, %s165
      %p174 = scmp.eq.s32.totalorder %s28, 0
      %p175 = por %p173, %p174
      %p176 = scmp.ne.s32.totalorder %s164, %s165
      %p177 = scmp.eq.s32.totalorder %s29, 1
      %p178 = por %p176, %p177
      %p180 = scmp.ne.s32.totalorder %s165, %s179
      %p181 = scmp.eq.s32.totalorder %s29, 0
      %p182 = por %p180, %p181
      %s184 = sadd.s32 %s183, 1
      %p187 = scmp.eq.s32.totalorder %s23, 1
      %p188 = scmp.ne.s32.totalorder %s183, %s185
      %p189 = scmp.eq.s32.totalorder %s23, 0
      %p190 = por %p188, %p189
      %p191 = scmp.ne.s32.totalorder %s183, %s185
      %p192 = scmp.eq.s32.totalorder %s28, 1
      %p193 = por %p191, %p192
      %p194 = scmp.ne.s32.totalorder %s185, %s186
      %p195 = scmp.eq.s32.totalorder %s28, 0
      %p196 = por %p194, %p195
      %p197 = scmp.ne.s32.totalorder %s185, %s186
      %p198 = scmp.eq.s32.totalorder %s29, 1
      %p199 = por %p197, %p198
      %p201 = scmp.ne.s32.totalorder %s186, %s200
      %p202 = scmp.eq.s32.totalorder %s29, 0
      %p203 = por %p201, %p202
      %s205 = sadd.s32 %s204, 1
      %p208 = scmp.eq.s32.totalorder %s23, 1
      %p209 = scmp.ne.s32.totalorder %s204, %s206
      %p210 = scmp.eq.s32.totalorder %s23, 0
      %p211 = por %p209, %p210
      %p212 = scmp.ne.s32.totalorder %s204, %s206
      %p213 = scmp.eq.s32.totalorder %s28, 1
      %p214 = por %p212, %p213
      %p215 = scmp.ne.s32.totalorder %s206, %s207
      %p216 = scmp.eq.s32.totalorder %s28, 0
      %p217 = por %p215, %p216
      %p218 = scmp.ne.s32.totalorder %s206, %s207
      %p219 = scmp.eq.s32.totalorder %s29, 1
      %p220 = por %p218, %p219
      %p222 = scmp.ne.s32.totalorder %s207, %s221
      %p223 = scmp.eq.s32.totalorder %s29, 0
      %p224 = por %p222, %p223
      %s226 = sadd.s32 %s225, 1
      %p229 = scmp.eq.s32.totalorder %s23, 1
      %p230 = scmp.ne.s32.totalorder %s225, %s227
      %p231 = scmp.eq.s32.totalorder %s23, 0
      %p232 = por %p230, %p231
      %p233 = scmp.ne.s32.totalorder %s225, %s227
      %p234 = scmp.eq.s32.totalorder %s28, 1
      %p235 = por %p233, %p234
      %p236 = scmp.ne.s32.totalorder %s227, %s228
      %p237 = scmp.eq.s32.totalorder %s28, 0
      %p238 = por %p236, %p237
      %p239 = scmp.ne.s32.totalorder %s227, %s228
      %p240 = scmp.eq.s32.totalorder %s29, 1
      %p241 = por %p239, %p240
      %p243 = scmp.ne.s32.totalorder %s228, %s242
      %p244 = scmp.eq.s32.totalorder %s29, 0
      %p245 = por %p243, %p244
      %s247 = sadd.s32 %s246, 1
      %p250 = scmp.eq.s32.totalorder %s23, 1
      %p251 = scmp.ne.s32.totalorder %s246, %s248
      %p252 = scmp.eq.s32.totalorder %s23, 0
      %p253 = por %p251, %p252
      %p254 = scmp.ne.s32.totalorder %s246, %s248
      %p255 = scmp.eq.s32.totalorder %s28, 1
      %p256 = por %p254, %p255
      %p257 = scmp.ne.s32.totalorder %s248, %s249
      %p258 = scmp.eq.s32.totalorder %s28, 0
      %p259 = por %p257, %p258
      %p260 = scmp.ne.s32.totalorder %s248, %s249
      %p261 = scmp.eq.s32.totalorder %s29, 1
      %p262 = por %p260, %p261
      %p264 = scmp.ne.s32.totalorder %s249, %s263
      %p265 = scmp.eq.s32.totalorder %s29, 0
      %p266 = por %p264, %p265
      %s268 = sadd.s32 %s267, 1
      %p271 = scmp.eq.s32.totalorder %s23, 1
      %p272 = scmp.ne.s32.totalorder %s267, %s269
      %p273 = scmp.eq.s32.totalorder %s23, 0
      %p274 = por %p272, %p273
      %p275 = scmp.ne.s32.totalorder %s267, %s269
      %p276 = scmp.eq.s32.totalorder %s28, 1
      %p277 = por %p275, %p276
      %p278 = scmp.ne.s32.totalorder %s269, %s270
      %p279 = scmp.eq.s32.totalorder %s28, 0
      %p280 = por %p278, %p279
      %p281 = scmp.ne.s32.totalorder %s269, %s270
      %p282 = scmp.eq.s32.totalorder %s29, 1
      %p283 = por %p281, %p282
      %p285 = scmp.ne.s32.totalorder %s270, %s284
      %p286 = scmp.eq.s32.totalorder %s29, 0
      %p287 = por %p285, %p286
      %s289 = sadd.s32 %s288, 1
      %p292 = scmp.eq.s32.totalorder %s23, 1
      %p293 = scmp.ne.s32.totalorder %s288, %s290
      %p294 = scmp.eq.s32.totalorder %s23, 0
      %p295 = por %p293, %p294
      %p296 = scmp.ne.s32.totalorder %s288, %s290
      %p297 = scmp.eq.s32.totalorder %s28, 1
      %p298 = por %p296, %p297
      %p299 = scmp.ne.s32.totalorder %s290, %s291
      %p300 = scmp.eq.s32.totalorder %s28, 0
      %p301 = por %p299, %p300
      %p302 = scmp.ne.s32.totalorder %s290, %s291
      %p303 = scmp.eq.s32.totalorder %s29, 1
      %p304 = por %p302, %p303
      %p306 = scmp.ne.s32.totalorder %s291, %s305
      %p307 = scmp.eq.s32.totalorder %s29, 0
      %p308 = por %p306, %p307
      %s310 = sadd.s32 %s309, 1
      %p313 = scmp.eq.s32.totalorder %s23, 1
      %p314 = scmp.ne.s32.totalorder %s309, %s311
      %p315 = scmp.eq.s32.totalorder %s23, 0
      %p316 = por %p314, %p315
      %p317 = scmp.ne.s32.totalorder %s309, %s311
      %p318 = scmp.eq.s32.totalorder %s28, 1
      %p319 = por %p317, %p318
      %p320 = scmp.ne.s32.totalorder %s311, %s312
      %p321 = scmp.eq.s32.totalorder %s28, 0
      %p322 = por %p320, %p321
      %p323 = scmp.ne.s32.totalorder %s311, %s312
      %p324 = scmp.eq.s32.totalorder %s29, 1
      %p325 = por %p323, %p324
      %p327 = scmp.ne.s32.totalorder %s312, %s326
      %p328 = scmp.eq.s32.totalorder %s29, 0
      %p329 = por %p327, %p328
      %s330 = ssub.s32 %s23, %s30
      %p331 = scmp.eq.s32.totalorder %s330, 0
      %s333 = sadd.s32 %s332, 1
      %s334 = scalar_select %p331, %s332, %s333
      %p337 = pneg %p331
      %p338 = scmp.eq.s32.totalorder %s23, 1
      %p339 = por %p337, %p338
      %p340 = scmp.ne.s32.totalorder %s332, %s335
      %p341 = scmp.eq.s32.totalorder %s23, 0
      %p342 = por %p340, %p341
      %p343 = scmp.ne.s32.totalorder %s332, %s335
      %p344 = scmp.eq.s32.totalorder %s28, 1
      %p345 = por %p343, %p344
      %p346 = scmp.ne.s32.totalorder %s335, %s336
      %p347 = scmp.eq.s32.totalorder %s28, 0
      %p348 = por %p346, %p347
      %p349 = scmp.ne.s32.totalorder %s335, %s336
      %p350 = scmp.eq.s32.totalorder %s29, 1
      %p351 = por %p349, %p350
      %p353 = scmp.ne.s32.totalorder %s336, %s352
      %p354 = scmp.eq.s32.totalorder %s29, 0
      %p355 = por %p353, %p354
      %p356 = scmp.le.s32.totalorder 1, %s23
      %p357 = scmp.lt.s32.totalorder %s23, 3
      %p358 = pnand %p356, %p357
      %p359 = pneg %p358
      // Predicated region
      $region9: #{tpu_custom_call.1} parent=5 // pred_check
        _
      $region10: #{tpu_custom_call.1} parent=5 // pred_check_branch
        %361 = sbr.rel (%p358) target = $region12
      $region11: #{tpu_custom_call.1} parent=5 // pred_region
        %s362 = ssub.s32 %s23, 1
        // Predicated region
        $region13: #{tpu_custom_call.1} parent=11 // pred_check
          %p363 = pneg %p70
        $region14: #{tpu_custom_call.1} parent=11 // pred_check_branch
          %365 = sbr.rel (%p363) target = $region16
        $region15: #{tpu_custom_call.1} parent=11 // pred_region
          _
        $region16: #{tpu_custom_call.1} parent=11 // pred_fallthru
          _
        // Predicated region
        $region17: #{tpu_custom_call.1} parent=11 // pred_check
          %p366 = pneg %p91
        $region18: #{tpu_custom_call.1} parent=11 // pred_check_branch
          %368 = sbr.rel (%p366) target = $region20
        $region19: #{tpu_custom_call.1} parent=11 // pred_region
          _
        $region20: #{tpu_custom_call.1} parent=11 // pred_fallthru
          _
        // Predicated region
        $region21: #{tpu_custom_call.1} parent=11 // pred_check
          %p369 = pneg %p112
        $region22: #{tpu_custom_call.1} parent=11 // pred_check_branch
          %371 = sbr.rel (%p369) target = $region24
        $region23: #{tpu_custom_call.1} parent=11 // pred_region
          _
        $region24: #{tpu_custom_call.1} parent=11 // pred_fallthru
          _
        // Predicated region
        $region25: #{tpu_custom_call.1} parent=11 // pred_check
          %p372 = pneg %p133
        $region26: #{tpu_custom_call.1} parent=11 // pred_check_branch
          %374 = sbr.rel (%p372) target = $region28
        $region27: #{tpu_custom_call.1} parent=11 // pred_region
          _
        $region28: #{tpu_custom_call.1} parent=11 // pred_fallthru
          _
        // Predicated region
        $region29: #{tpu_custom_call.1} parent=11 // pred_check
          %p375 = pneg %p154
        $region30: #{tpu_custom_call.1} parent=11 // pred_check_branch
          %377 = sbr.rel (%p375) target = $region32
        $region31: #{tpu_custom_call.1} parent=11 // pred_region
          _
        $region32: #{tpu_custom_call.1} parent=11 // pred_fallthru
          _
        // Predicated region
        $region33: #{tpu_custom_call.1} parent=11 // pred_check
          %p378 = pneg %p175
        $region34: #{tpu_custom_call.1} parent=11 // pred_check_branch
          %380 = sbr.rel (%p378) target = $region36
        $region35: #{tpu_custom_call.1} parent=11 // pred_region
          _
        $region36: #{tpu_custom_call.1} parent=11 // pred_fallthru
          _
        // Predicated region
        $region37: #{tpu_custom_call.1} parent=11 // pred_check
          %p381 = pneg %p196
        $region38: #{tpu_custom_call.1} parent=11 // pred_check_branch
          %383 = sbr.rel (%p381) target = $region40
        $region39: #{tpu_custom_call.1} parent=11 // pred_region
          _
        $region40: #{tpu_custom_call.1} parent=11 // pred_fallthru
          _
        // Predicated region
        $region41: #{tpu_custom_call.1} parent=11 // pred_check
          %p384 = pneg %p217
        $region42: #{tpu_custom_call.1} parent=11 // pred_check_branch
          %386 = sbr.rel (%p384) target = $region44
        $region43: #{tpu_custom_call.1} parent=11 // pred_region
          _
        $region44: #{tpu_custom_call.1} parent=11 // pred_fallthru
          _
        // Predicated region
        $region45: #{tpu_custom_call.1} parent=11 // pred_check
          %p387 = pneg %p238
        $region46: #{tpu_custom_call.1} parent=11 // pred_check_branch
          %389 = sbr.rel (%p387) target = $region48
        $region47: #{tpu_custom_call.1} parent=11 // pred_region
          _
        $region48: #{tpu_custom_call.1} parent=11 // pred_fallthru
          _
        // Predicated region
        $region49: #{tpu_custom_call.1} parent=11 // pred_check
          %p390 = pneg %p259
        $region50: #{tpu_custom_call.1} parent=11 // pred_check_branch
          %392 = sbr.rel (%p390) target = $region52
        $region51: #{tpu_custom_call.1} parent=11 // pred_region
          _
        $region52: #{tpu_custom_call.1} parent=11 // pred_fallthru
          _
        // Predicated region
        $region53: #{tpu_custom_call.1} parent=11 // pred_check
          %p393 = pneg %p280
        $region54: #{tpu_custom_call.1} parent=11 // pred_check_branch
          %395 = sbr.rel (%p393) target = $region56
        $region55: #{tpu_custom_call.1} parent=11 // pred_region
          _
        $region56: #{tpu_custom_call.1} parent=11 // pred_fallthru
          _
        // Predicated region
        $region57: #{tpu_custom_call.1} parent=11 // pred_check
          %p396 = pneg %p301
        $region58: #{tpu_custom_call.1} parent=11 // pred_check_branch
          %398 = sbr.rel (%p396) target = $region60
        $region59: #{tpu_custom_call.1} parent=11 // pred_region
          _
        $region60: #{tpu_custom_call.1} parent=11 // pred_fallthru
          _
        // Predicated region
        $region61: #{tpu_custom_call.1} parent=11 // pred_check
          %p399 = pneg %p322
        $region62: #{tpu_custom_call.1} parent=11 // pred_check_branch
          %401 = sbr.rel (%p399) target = $region64
        $region63: #{tpu_custom_call.1} parent=11 // pred_region
          _
        $region64: #{tpu_custom_call.1} parent=11 // pred_fallthru
          _
      $region12: #{tpu_custom_call.1} parent=5 // pred_fallthru
        _
      %p402 = scmp.lt.s32.totalorder %s23, 2
      // Predicated region
      $region65: #{tpu_custom_call.1} parent=5 // pred_check
        %p403 = pneg %p402
      $region66: #{tpu_custom_call.1} parent=5 // pred_check_branch
        %405 = sbr.rel (%p403) target = $region68
      $region67: #{tpu_custom_call.1} parent=5 // pred_region
        // Predicated region
        $region69: #{tpu_custom_call.1} parent=67 // pred_check
          %p406 = pneg %p43
        $region70: #{tpu_custom_call.1} parent=67 // pred_check_branch
          %408 = sbr.rel (%p406) target = $region72
        $region71: #{tpu_custom_call.1} parent=67 // pred_region
          %p409 = scmp.lt.s32.totalorder %s23, 1
          %s410 = scalar_select %p409, %s23, 1
          %s411 = smul.addr %s410, 2
          %s412 = smul.addr %s411, 4
          %s413 = scalar_lea.vmem %s0, %s412
        $region72: #{tpu_custom_call.1} parent=67 // pred_fallthru
          _
      $region68: #{tpu_custom_call.1} parent=5 // pred_fallthru
        _
      %p414 = scmp.le.s32.totalorder 1, %s23
      %p415 = scmp.lt.s32.totalorder %s23, 3
      %p416 = pnand %p414, %p415
      %p417 = pneg %p416
      // Predicated region
      $region73: #{tpu_custom_call.1} parent=5 // pred_check
        _
      $region74: #{tpu_custom_call.1} parent=5 // pred_check_branch
        %419 = sbr.rel (%p416) target = $region76
      $region75: #{tpu_custom_call.1} parent=5 // pred_region
        %s420 = ssub.s32 %s23, 1
        %p421 = scmp.lt.s32.totalorder %s28, 1
        %s422 = scalar_select %p421, %s28, 1
        %s423 = smul.addr %s422, 2
        %s424 = smul.addr %s423, 4
        %s425 = scalar_lea.vmem %s0, %s424
        %p426 = pneg %p49
        %p427 = pneg %p46
        %p428 = pneg %p70
        %p429 = pneg %p67
        %p430 = pneg %p91
        %p431 = pneg %p88
        %p432 = pneg %p112
        %p433 = pneg %p109
        %p434 = pneg %p133
        %p435 = pneg %p130
        %p436 = pneg %p154
        %p437 = pneg %p151
        %p438 = pneg %p175
        %p439 = pneg %p172
        %p440 = pneg %p196
        %p441 = pneg %p193
        %p442 = pneg %p217
        %p443 = pneg %p214
        %p444 = pneg %p238
        %p445 = pneg %p235
        %p446 = pneg %p259
        %p447 = pneg %p256
        %p448 = pneg %p280
        %p449 = pneg %p277
        %p450 = pneg %p301
        %p451 = pneg %p298
        %p452 = pneg %p322
        %p453 = pneg %p319
        %p454 = pneg %p348
        %p455 = pneg %p345
        %s456 = sand.u32 %s335, 1
        %s457 = scalar_lea.sflag [#allocation5], %s456
        %s458 = sand.u32 %s335, 1
        %s459 = smul.addr %s458, 80
        %s460 = scalar_lea.vmem [#allocation4], %s459
        %p461 = scmp.lt.s32.totalorder %s28, 1
        %s462 = scalar_select %p461, %s28, 1
        %s463 = smul.addr %s462, 2
        %s464 = smul.addr %s463, 4
        %s465 = scalar_lea.vmem %s0, %s464
        %466 = vst [vmem:[#allocation2] sm:$0xff] 0.0
        %467 = vst [vmem:[#allocation2 + $0x8] sm:$0xf] 0.0
        %v468 = vld [vmem:[%s465] sm:$0xff]
        %470 = vrot.lane.b32.xlu0 %v468, 34
        %v471 = vpop.permute.xlu0 %470
        %v472 = vrot.slane %v471, 4
        %vm473 = vcmask 277504
        %v474 = vsel %vm473, %v472, %v471
        %vm477 = vcmask 1043728
        %vm478 = vcmask 1047556
        %vm479 = vmor %vm478, %vm477
        %480 = vst.msk [vmem:[#allocation2] sm:$0xff] %vm479, %v474
        %vm481 = vcmask 273408
        %482 = vst.msk [vmem:[#allocation2 + $0x8] sm:$0xf] %vm481, %v472
        %v483 = vld [vmem:[#allocation2] sm:$0xff]
        %v484 = vld [vmem:[#allocation2 + $0x8] sm:$0xf]
        %v485 = vld [vmem:[%s1] sm:$0x1f]
        %v486 = vld [vmem:[%s1 + $0x8] sm:$0x1f]
        %v487 = vlaneseq
        %v488 = vand.u32 %v487, 127
        %v489 = vadd.s32 %v488, 128
        %v490 = vadd.s32 %v488, 256
        %vm491 = vcmp.ge.s32.totalorder %v488, 34
        %vm492 = vcmp.ge.s32.totalorder %v489, 34
        %vm493 = vcmp.ge.s32.totalorder %v490, 34
        %vm494 = vcmp.lt.s32.totalorder %v488, 290
        %vm495 = vcmp.lt.s32.totalorder %v489, 290
        %vm496 = vcmp.lt.s32.totalorder %v490, 290
        %vm497 = vmand %vm491, %vm494
        %vm498 = vmand %vm492, %vm495
        %vm499 = vmand %vm493, %vm496
        %v500 = vld [vmem:[%s2] sm:$0xff]
        %v501 = vld [vmem:[%s3] sm:$0xff]
        %503 = vset.pattern.permute.xlu0 0
        %504 = vperm.xlu0 %503, %v501
        %v505 = vpop.permute.xlu0 %504
        %v509 = vcombine.high %v483, %v483
        %510 = vrot.lane.b32.xlu0 %v483, 94
        %v511 = vpop.permute.xlu0 %510
        %512 = vrot.lane.b32.xlu0 %v509, 94
        %v513 = vpop.permute.xlu0 %512
        %514 = vrot.lane.b32.xlu0 %v484, 94
        %v515 = vpop.permute.xlu0 %514
        %vm516 = vcmask 769024
        %v517 = vsel %vm516, %v511, %v513
        %v518 = vsel %vm516, %v513, %v515
        %vm519 = vcmask 31744
        %v521 = vsel %vm519, %v500, 0
        %vm523 = vcmask 1043456
        %v524 = vsel %vm523, %v517, 0
        %v526 = vsel %vm523, %v518, 0
        %528 = vmatprep.subr.mxu0 %v526
        %529 = vmatpush1.msra.mxu0 %v524
        %530 = vmatprep.subr.mxu0 0.0
        %531 = vmatpush1.msra.mxu0 0.0
        %532 = vmatprep.subr.mxu0 0.0
        %533 = vmatpush1.msra.mxu0 0.0
        %534 = vmatprep.subr.mxu0 0.0
        %535 = vmatpush1.msra.mxu0 0.0
        %536 = vmatprep.subr.mxu0 0.0
        %537 = vmatpush1.msra.mxu0 0.0
        %538 = vmatprep.subr.mxu0 0.0
        %539 = vmatpush1.msra.mxu0 0.0
        %540 = vmatprep.subr.mxu0 0.0
        %541 = vmatpush1.msra.mxu0 0.0
        %542 = vmatprep.subr.mxu0 0.0
        %543 = vmatpush1.msra.mxu0 0.0
        %544 = vmatprep.subr.mxu0 0.0
        %545 = vmatpush1.msra.mxu0 0.0
        %546 = vmatprep.subr.mxu0 0.0
        %547 = vmatpush1.msra.mxu0 0.0
        %548 = vmatprep.subr.mxu0 0.0
        %549 = vmatpush1.msra.mxu0 0.0
        %550 = vmatprep.subr.mxu0 0.0
        %551 = vmatpush1.msra.mxu0 0.0
        %552 = vmatprep.subr.mxu0 0.0
        %553 = vmatpush1.msra.mxu0 0.0
        %554 = vmatprep.subr.mxu0 0.0
        %555 = vmatpush1.msra.mxu0 0.0
        %556 = vmatprep.subr.mxu0 0.0
        %557 = vmatpush1.msra.mxu0 0.0
        %558 = vmatprep.subr.mxu0 0.0
        %559 = vmatpush1.msra.mxu0 0.0
        %560 = vmatprep.subr.mxu0 0.0
        %561 = vmatpush1.msra.mxu0 0.0
        %562 = vmatprep.subr.mxu0 0.0
        %563 = vmatpush1.msra.mxu0 0.0
        %564 = vmatprep.subr.mxu0 0.0
        %565 = vmatpush1.msra.mxu0 0.0
        %566 = vmatprep.subr.mxu0 0.0
        %567 = vmatpush1.msra.mxu0 0.0
        %568 = vmatprep.subr.mxu0 0.0
        %569 = vmatpush1.msra.mxu0 0.0
        %570 = vmatprep.subr.mxu0 0.0
        %571 = vmatpush1.msra.mxu0 0.0
        %572 = vmatprep.subr.mxu0 0.0
        %573 = vmatpush1.msra.mxu0 0.0
        %574 = vmatprep.subr.mxu0 0.0
        %575 = vmatpush1.msra.mxu0 0.0
        %576 = vmatprep.subr.mxu0 0.0
        %577 = vmatpush1.msra.mxu0 0.0
        %578 = vmatprep.subr.mxu0 0.0
        %579 = vmatpush1.msra.mxu0 0.0
        %580 = vmatprep.subr.mxu0 0.0
        %581 = vmatpush1.msra.mxu0 0.0
        %582 = vmatprep.subr.mxu0 0.0
        %583 = vmatpush1.msra.mxu0 0.0
        %584 = vmatprep.subr.mxu0 0.0
        %585 = vmatpush1.msra.mxu0 0.0
        %586 = vmatprep.subr.mxu0 0.0
        %587 = vmatpush1.msra.mxu0 0.0
        %588 = vmatprep.subr.mxu0 0.0
        %589 = vmatpush1.msra.mxu0 0.0
        %590 = vmatprep.subr.mxu0 0.0
        %591 = vmatpush1.msra.mxu0 0.0
        %592 = vmatprep.mubr.f32.mxu0 0.0
        %593 = vmatmul.mubr.f32.gmra.mrb[0].mxu0 %v521
        %v594 = vpop.f32.mrb[0].mxu0
        %v595 = vadd.f32 %v505, %v594
        %v596 = vpop.f32.mrb[0].mxu0
        %v597 = vadd.f32 %v505, %v596
        %598 = vdwg.mxu0
        %v599 = vmax.f32 %v595, 0.0
        %v600 = vmax.f32 %v597, 0.0
        %v601 = vld [vmem:[%s4] sm:$0xf]
        %v602 = vld [vmem:[%s5] sm:$0xf]
        %604 = vset.pattern.permute.xlu0 0
        %605 = vperm.xlu0 %604, %v602
        %v606 = vpop.permute.xlu0 %605
        %v609 = vsel %vm519, %v601, 0
        %v611 = vsel %vm523, %v483, 0
        %v613 = vsel %vm523, %v509, 0
        %v615 = vsel %vm523, %v484, 0
        %617 = vmatprep.subr.mxu0 %v613
        %618 = vmatpush1.msra.mxu0 %v611
        %619 = vmatprep.subr.mxu0 0.0
        %620 = vmatpush1.msra.mxu0 0.0
        %621 = vmatprep.subr.mxu0 0.0
        %622 = vmatpush1.msra.mxu0 0.0
        %623 = vmatprep.subr.mxu0 0.0
        %624 = vmatpush1.msra.mxu0 0.0
        %625 = vmatprep.subr.mxu0 0.0
        %626 = vmatpush1.msra.mxu0 0.0
        %627 = vmatprep.subr.mxu0 0.0
        %628 = vmatpush1.msra.mxu0 0.0
        %629 = vmatprep.subr.mxu0 0.0
        %630 = vmatpush1.msra.mxu0 0.0
        %631 = vmatprep.subr.mxu0 0.0
        %632 = vmatpush1.msra.mxu0 0.0
        %633 = vmatprep.subr.mxu0 0.0
        %634 = vmatpush1.msra.mxu0 0.0
        %635 = vmatprep.subr.mxu0 0.0
        %636 = vmatpush1.msra.mxu0 0.0
        %637 = vmatprep.subr.mxu0 0.0
        %638 = vmatpush1.msra.mxu0 0.0
        %639 = vmatprep.subr.mxu0 0.0
        %640 = vmatpush1.msra.mxu0 0.0
        %641 = vmatprep.subr.mxu0 0.0
        %642 = vmatpush1.msra.mxu0 0.0
        %643 = vmatprep.subr.mxu0 0.0
        %644 = vmatpush1.msra.mxu0 0.0
        %645 = vmatprep.subr.mxu0 0.0
        %646 = vmatpush1.msra.mxu0 0.0
        %647 = vmatprep.subr.mxu0 0.0
        %648 = vmatpush1.msra.mxu0 0.0
        %649 = vmatprep.subr.mxu0 0.0
        %650 = vmatpush1.msra.mxu0 0.0
        %651 = vmatprep.subr.mxu0 0.0
        %652 = vmatpush1.msra.mxu0 0.0
        %653 = vmatprep.subr.mxu0 0.0
        %654 = vmatpush1.msra.mxu0 0.0
        %655 = vmatprep.subr.mxu0 0.0
        %656 = vmatpush1.msra.mxu0 0.0
        %657 = vmatprep.subr.mxu0 0.0
        %658 = vmatpush1.msra.mxu0 0.0
        %659 = vmatprep.subr.mxu0 0.0
        %660 = vmatpush1.msra.mxu0 0.0
        %661 = vmatprep.subr.mxu0 0.0
        %662 = vmatpush1.msra.mxu0 0.0
        %663 = vmatprep.subr.mxu0 0.0
        %664 = vmatpush1.msra.mxu0 0.0
        %665 = vmatprep.subr.mxu0 0.0
        %666 = vmatpush1.msra.mxu0 0.0
        %667 = vmatprep.subr.mxu0 0.0
        %668 = vmatpush1.msra.mxu0 0.0
        %669 = vmatprep.subr.mxu0 0.0
        %670 = vmatpush1.msra.mxu0 0.0
        %671 = vmatprep.subr.mxu0 0.0
        %672 = vmatpush1.msra.mxu0 0.0
        %673 = vmatprep.subr.mxu0 0.0
        %674 = vmatpush1.msra.mxu0 0.0
        %675 = vmatprep.subr.mxu0 0.0
        %676 = vmatpush1.msra.mxu0 0.0
        %677 = vmatprep.subr.mxu0 0.0
        %678 = vmatpush1.msra.mxu0 0.0
        %679 = vmatprep.subr.mxu0 0.0
        %680 = vmatpush1.msra.mxu0 0.0
        %681 = vmatprep.mubr.f32.mxu0 0.0
        %682 = vmatmul.mubr.f32.gmra.mrb[0].mxu0 %v609
        %v683 = vpop.f32.mrb[0].mxu0
        %v684 = vadd.f32 %v606, %v683
        %v685 = vpop.f32.mrb[0].mxu0
        %v686 = vadd.f32 %v606, %v685
        %687 = vdwg.mxu0
        %688 = vmatprep.subr.mxu0 0.0
        %689 = vmatpush1.msra.mxu0 %v615
        %690 = vmatprep.subr.mxu0 0.0
        %691 = vmatpush1.msra.mxu0 0.0
        %692 = vmatprep.subr.mxu0 0.0
        %693 = vmatpush1.msra.mxu0 0.0
        %694 = vmatprep.subr.mxu0 0.0
        %695 = vmatpush1.msra.mxu0 0.0
        %696 = vmatprep.subr.mxu0 0.0
        %697 = vmatpush1.msra.mxu0 0.0
        %698 = vmatprep.subr.mxu0 0.0
        %699 = vmatpush1.msra.mxu0 0.0
        %700 = vmatprep.subr.mxu0 0.0
        %701 = vmatpush1.msra.mxu0 0.0
        %702 = vmatprep.subr.mxu0 0.0
        %703 = vmatpush1.msra.mxu0 0.0
        %704 = vmatprep.subr.mxu0 0.0
        %705 = vmatpush1.msra.mxu0 0.0
        %706 = vmatprep.subr.mxu0 0.0
        %707 = vmatpush1.msra.mxu0 0.0
        %708 = vmatprep.subr.mxu0 0.0
        %709 = vmatpush1.msra.mxu0 0.0
        %710 = vmatprep.subr.mxu0 0.0
        %711 = vmatpush1.msra.mxu0 0.0
        %712 = vmatprep.subr.mxu0 0.0
        %713 = vmatpush1.msra.mxu0 0.0
        %714 = vmatprep.subr.mxu0 0.0
        %715 = vmatpush1.msra.mxu0 0.0
        %716 = vmatprep.subr.mxu0 0.0
        %717 = vmatpush1.msra.mxu0 0.0
        %718 = vmatprep.subr.mxu0 0.0
        %719 = vmatpush1.msra.mxu0 0.0
        %720 = vmatprep.subr.mxu0 0.0
        %721 = vmatpush1.msra.mxu0 0.0
        %722 = vmatprep.subr.mxu0 0.0
        %723 = vmatpush1.msra.mxu0 0.0
        %724 = vmatprep.subr.mxu0 0.0
        %725 = vmatpush1.msra.mxu0 0.0
        %726 = vmatprep.subr.mxu0 0.0
        %727 = vmatpush1.msra.mxu0 0.0
        %728 = vmatprep.subr.mxu0 0.0
        %729 = vmatpush1.msra.mxu0 0.0
        %730 = vmatprep.subr.mxu0 0.0
        %731 = vmatpush1.msra.mxu0 0.0
        %732 = vmatprep.subr.mxu0 0.0
        %733 = vmatpush1.msra.mxu0 0.0
        %734 = vmatprep.subr.mxu0 0.0
        %735 = vmatpush1.msra.mxu0 0.0
        %736 = vmatprep.subr.mxu0 0.0
        %737 = vmatpush1.msra.mxu0 0.0
        %738 = vmatprep.subr.mxu0 0.0
        %739 = vmatpush1.msra.mxu0 0.0
        %740 = vmatprep.subr.mxu0 0.0
        %741 = vmatpush1.msra.mxu0 0.0
        %742 = vmatprep.subr.mxu0 0.0
        %743 = vmatpush1.msra.mxu0 0.0
        %744 = vmatprep.subr.mxu0 0.0
        %745 = vmatpush1.msra.mxu0 0.0
        %746 = vmatprep.subr.mxu0 0.0
        %747 = vmatpush1.msra.mxu0 0.0
        %748 = vmatprep.subr.mxu0 0.0
        %749 = vmatpush1.msra.mxu0 0.0
        %750 = vmatprep.subr.mxu0 0.0
        %751 = vmatpush1.msra.mxu0 0.0
        %752 = vmatprep.mubr.f32.mxu0 0.0
        %753 = vmatmul.mubr.f32.gmra.mrb[0].mxu0 %v609
        %v754 = vpop.f32.mrb[0].mxu0
        %v755 = vadd.f32 %v606, %v754
        %v756 = vpop.f32.mrb[0].mxu0
        %757 = vdwg.mxu0
        %v758 = vmax.f32 %v684, 0.0
        %v759 = vmax.f32 %v686, 0.0
        %v760 = vmax.f32 %v755, 0.0
        %v761 = vsel %vm497, 1, 0
        %v762 = vsel %vm498, 1, 0
        %v763 = vsel %vm499, 1, 0
        %vm764 = vcmp.eq.s32.totalorder %v761, 1
        %vm765 = vcmp.eq.s32.totalorder %v762, 1
        %vm766 = vcmp.eq.s32.totalorder %v763, 1
        %v767 = vsel %vm764, %v758, 0.0
        %v768 = vsel %vm765, %v759, 0.0
        %v769 = vsel %vm766, %v760, 0.0
        %v770 = vlaneseq
        %v771 = vshrl.u32 %v770, 7
        %v772 = vsub.s32 1, %v771
        %v773 = vrot.slane %v485, %v772
        %v774 = vlaneseq
        %v775 = vshrl.u32 %v774, 7
        %v776 = vsub.s32 1, %v775
        %v777 = vrot.slane %v486, %v776
        %780 = vrot.lane.b32.xlu0 %v773, 17
        %v781 = vpop.permute.xlu0 %780
        %782 = vrot.lane.b32.xlu0 %v777, 17
        %v783 = vpop.permute.xlu0 %782
        %vm784 = vcmask 138240
        %v785 = vsel %vm784, %v781, %v783
        %v789 = vmul.f32 %v767, %v781
        %v790 = vmul.f32 %v768, %v785
        %v791 = vmul.f32 %v769, %v783
        %795 = vrot.lane.b32.xlu0 %v789, 111
        %v796 = vpop.permute.xlu0 %795
        %797 = vrot.lane.b32.xlu0 %v790, 111
        %v798 = vpop.permute.xlu0 %797
        %799 = vrot.lane.b32.xlu0 %v791, 111
        %v800 = vpop.permute.xlu0 %799
        %vm801 = vcmask 908288
        %v802 = vsel %vm801, %v796, %v798
        %v803 = vsel %vm801, %v798, %v800
        %806 = vst [vmem:[#allocation3] sm:$0xf] %v802
        %807 = vst [vmem:[#allocation3 + $0x8] sm:$0xf] %v803
        %v811 = vrot.slane %v767, 4
        %v812 = vrot.slane %v768, 4
        %v813 = vrot.slane %v769, 4
        %814 = vrot.lane.b32.xlu0 %v811, 110
        %v815 = vpop.permute.xlu0 %814
        %816 = vrot.lane.b32.xlu0 %v812, 110
        %v817 = vpop.permute.xlu0 %816
        %818 = vrot.lane.b32.xlu0 %v813, 110
        %v819 = vpop.permute.xlu0 %818
        %vm820 = vcmask 900096
        %v821 = vsel %vm820, %v815, %v817
        %v822 = vsel %vm820, %v817, %v819
        %825 = vst [vmem:[#allocation3] sm:$0xf0] %v821
        %826 = vst [vmem:[#allocation3 + $0x8] sm:$0xf0] %v822
        %v827 = vlaneseq
        %v828 = vshrl.u32 %v827, 7
        %v829 = vsub.s32 3, %v828
        %v830 = vrot.slane %v485, %v829
        %v831 = vlaneseq
        %v832 = vshrl.u32 %v831, 7
        %v833 = vsub.s32 3, %v832
        %v834 = vrot.slane %v486, %v833
        %837 = vrot.lane.b32.xlu0 %v830, 19
        %v838 = vpop.permute.xlu0 %837
        %839 = vrot.lane.b32.xlu0 %v834, 19
        %v840 = vpop.permute.xlu0 %839
        %vm841 = vcmask 154624
        %v842 = vsel %vm841, %v838, %v840
        %v846 = vmul.f32 %v767, %v838
        %v847 = vmul.f32 %v768, %v842
        %v848 = vmul.f32 %v769, %v840
        %852 = vrot.lane.b32.xlu0 %v846, 109
        %v853 = vpop.permute.xlu0 %852
        %854 = vrot.lane.b32.xlu0 %v847, 109
        %v855 = vpop.permute.xlu0 %854
        %856 = vrot.lane.b32.xlu0 %v848, 109
        %v857 = vpop.permute.xlu0 %856
        %vm858 = vcmask 891904
        %v859 = vsel %vm858, %v853, %v855
        %v860 = vsel %vm858, %v855, %v857
        %863 = vst [vmem:[#allocation3 + $0x10] sm:$0xf] %v859
        %864 = vst [vmem:[#allocation3 + $0x18] sm:$0xf] %v860
        %865 = vrot.lane.b32.xlu0 %v773, 33
        %v866 = vpop.permute.xlu0 %865
        %867 = vrot.lane.b32.xlu0 %v777, 33
        %v868 = vpop.permute.xlu0 %867
        %vm869 = vcmask 269312
        %v870 = vsel %vm869, %v866, %v868
        %v874 = vmul.f32 %v767, %v866
        %v875 = vmul.f32 %v768, %v870
        %v876 = vmul.f32 %v769, %v868
        %v880 = vrot.slane %v874, 4
        %v881 = vrot.slane %v875, 4
        %v882 = vrot.slane %v876, 4
        %883 = vrot.lane.b32.xlu0 %v880, 95
        %v884 = vpop.permute.xlu0 %883
        %885 = vrot.lane.b32.xlu0 %v881, 95
        %v886 = vpop.permute.xlu0 %885
        %887 = vrot.lane.b32.xlu0 %v882, 95
        %v888 = vpop.permute.xlu0 %887
        %vm889 = vcmask 777216
        %v890 = vsel %vm889, %v884, %v886
        %v891 = vsel %vm889, %v886, %v888
        %894 = vst [vmem:[#allocation3 + $0x10] sm:$0xf0] %v890
        %895 = vst [vmem:[#allocation3 + $0x18] sm:$0xf0] %v891
        %896 = vrot.lane.b32.xlu0 %v767, 94
        %v897 = vpop.permute.xlu0 %896
        %898 = vrot.lane.b32.xlu0 %v768, 94
        %v899 = vpop.permute.xlu0 %898
        %900 = vrot.lane.b32.xlu0 %v769, 94
        %v901 = vpop.permute.xlu0 %900
        %v902 = vsel %vm516, %v897, %v899
        %v903 = vsel %vm516, %v899, %v901
        %906 = vst [vmem:[#allocation3 + $0x20] sm:$0xf] %v902
        %907 = vst [vmem:[#allocation3 + $0x28] sm:$0xf] %v903
        %908 = vrot.lane.b32.xlu0 %v830, 35
        %v909 = vpop.permute.xlu0 %908
        %910 = vrot.lane.b32.xlu0 %v834, 35
        %v911 = vpop.permute.xlu0 %910
        %vm912 = vcmask 285696
        %v913 = vsel %vm912, %v909, %v911
        %v917 = vmul.f32 %v767, %v909
        %v918 = vmul.f32 %v768, %v913
        %v919 = vmul.f32 %v769, %v911
        %v923 = vrot.slane %v917, 4
        %v924 = vrot.slane %v918, 4
        %v925 = vrot.slane %v919, 4
        %926 = vrot.lane.b32.xlu0 %v923, 93
        %v927 = vpop.permute.xlu0 %926
        %928 = vrot.lane.b32.xlu0 %v924, 93
        %v929 = vpop.permute.xlu0 %928
        %930 = vrot.lane.b32.xlu0 %v925, 93
        %v931 = vpop.permute.xlu0 %930
        %vm932 = vcmask 760832
        %v933 = vsel %vm932, %v927, %v929
        %v934 = vsel %vm932, %v929, %v931
        %937 = vst [vmem:[#allocation3 + $0x20] sm:$0xf0] %v933
        %938 = vst [vmem:[#allocation3 + $0x28] sm:$0xf0] %v934
        %939 = vrot.lane.b32.xlu0 %v773, 49
        %v940 = vpop.permute.xlu0 %939
        %941 = vrot.lane.b32.xlu0 %v777, 49
        %v942 = vpop.permute.xlu0 %941
        %vm943 = vcmask 400384
        %v944 = vsel %vm943, %v940, %v942
        %v948 = vmul.f32 %v767, %v940
        %v949 = vmul.f32 %v768, %v944
        %v950 = vmul.f32 %v769, %v942
        %954 = vrot.lane.b32.xlu0 %v948, 79
        %v955 = vpop.permute.xlu0 %954
        %956 = vrot.lane.b32.xlu0 %v949, 79
        %v957 = vpop.permute.xlu0 %956
        %958 = vrot.lane.b32.xlu0 %v950, 79
        %v959 = vpop.permute.xlu0 %958
        %vm960 = vcmask 646144
        %v961 = vsel %vm960, %v955, %v957
        %v962 = vsel %vm960, %v957, %v959
        %965 = vst [vmem:[#allocation3 + $0x30] sm:$0xf] %v961
        %966 = vst [vmem:[#allocation3 + $0x38] sm:$0xf] %v962
        %967 = vrot.lane.b32.xlu0 %v811, 78
        %v968 = vpop.permute.xlu0 %967
        %969 = vrot.lane.b32.xlu0 %v812, 78
        %v970 = vpop.permute.xlu0 %969
        %971 = vrot.lane.b32.xlu0 %v813, 78
        %v972 = vpop.permute.xlu0 %971
        %vm973 = vcmask 637952
        %v974 = vsel %vm973, %v968, %v970
        %v975 = vsel %vm973, %v970, %v972
        %978 = vst [vmem:[#allocation3 + $0x30] sm:$0xf0] %v974
        %979 = vst [vmem:[#allocation3 + $0x38] sm:$0xf0] %v975
        %980 = vrot.lane.b32.xlu0 %v830, 51
        %v981 = vpop.permute.xlu0 %980
        %982 = vrot.lane.b32.xlu0 %v834, 51
        %v983 = vpop.permute.xlu0 %982
        %vm984 = vcmask 416768
        %v985 = vsel %vm984, %v981, %v983
        %v989 = vmul.f32 %v767, %v981
        %v990 = vmul.f32 %v768, %v985
        %v991 = vmul.f32 %v769, %v983
        %995 = vrot.lane.b32.xlu0 %v989, 77
        %v996 = vpop.permute.xlu0 %995
        %997 = vrot.lane.b32.xlu0 %v990, 77
        %v998 = vpop.permute.xlu0 %997
        %999 = vrot.lane.b32.xlu0 %v991, 77
        %v1000 = vpop.permute.xlu0 %999
        %vm1001 = vcmask 629760
        %v1002 = vsel %vm1001, %v996, %v998
        %v1003 = vsel %vm1001, %v998, %v1000
        %1006 = vst [vmem:[#allocation3 + $0x40] sm:$0xf] %v1002
        %1007 = vst [vmem:[#allocation3 + $0x48] sm:$0xf] %v1003
        %v1008 = vld [vmem:[%s6] sm:$0xff]
        %v1009 = vld [vmem:[%s6 + $0x8] sm:$0xff]
        %v1010 = vld [vmem:[#allocation3] sm:$0xff]
        %v1011 = vld [vmem:[#allocation3 + $0x8] sm:$0xff]
        %v1012 = vld [vmem:[#allocation3 + $0x10] sm:$0xff]
        %v1013 = vld [vmem:[#allocation3 + $0x18] sm:$0xff]
        %v1014 = vld [vmem:[#allocation3 + $0x20] sm:$0xff]
        %v1015 = vld [vmem:[#allocation3 + $0x28] sm:$0xff]
        %v1016 = vld [vmem:[#allocation3 + $0x30] sm:$0xff]
        %v1017 = vld [vmem:[#allocation3 + $0x38] sm:$0xff]
        %v1018 = vld [vmem:[#allocation3 + $0x40] sm:$0xf]
        %v1019 = vld [vmem:[#allocation3 + $0x48] sm:$0xf]
        %v1020 = vld [vmem:[%s7] sm:$0xff]
        %v1021 = vld [vmem:[%s7 + $0x8] sm:$0xff]
        %1023 = vset.pattern.permute.xlu0 0
        %1024 = vperm.xlu0 %1023, %v1020
        %v1025 = vpop.permute.xlu0 %1024
        %1028 = vset.pattern.permute.xlu0 0
        %1029 = vperm.xlu0 %1028, %v1021
        %v1030 = vpop.permute.xlu0 %1029
        %vm1032 = vcmask 293888
        %v1034 = vsel %vm1032, %v1008, 0
        %v1037 = vsel %vm1032, %v1009, 0
        %v1040 = vsel %vm523, %v1018, 0
        %v1043 = vsel %vm523, %v1019, 0
        %1045 = vmatprep.subr.mxu0 %v1011
        %1046 = vmatpush1.msra.mxu0 %v1010
        %1047 = vmatprep.subr.mxu0 %v1013
        %1048 = vmatpush1.msra.mxu0 %v1012
        %1049 = vmatprep.subr.mxu0 %v1015
        %1050 = vmatpush1.msra.mxu0 %v1014
        %1051 = vmatprep.subr.mxu0 %v1017
        %1052 = vmatpush1.msra.mxu0 %v1016
        %1053 = vmatprep.subr.mxu0 %v1043
        %1054 = vmatpush1.msra.mxu0 %v1040
        %1055 = vmatprep.subr.mxu0 0.0
        %1056 = vmatpush1.msra.mxu0 0.0
        %1057 = vmatprep.subr.mxu0 0.0
        %1058 = vmatpush1.msra.mxu0 0.0
        %1059 = vmatprep.subr.mxu0 0.0
        %1060 = vmatpush1.msra.mxu0 0.0
        %1061 = vmatprep.subr.mxu0 0.0
        %1062 = vmatpush1.msra.mxu0 0.0
        %1063 = vmatprep.subr.mxu0 0.0
        %1064 = vmatpush1.msra.mxu0 0.0
        %1065 = vmatprep.subr.mxu0 0.0
        %1066 = vmatpush1.msra.mxu0 0.0
        %1067 = vmatprep.subr.mxu0 0.0
        %1068 = vmatpush1.msra.mxu0 0.0
        %1069 = vmatprep.subr.mxu0 0.0
        %1070 = vmatpush1.msra.mxu0 0.0
        %1071 = vmatprep.subr.mxu0 0.0
        %1072 = vmatpush1.msra.mxu0 0.0
        %1073 = vmatprep.subr.mxu0 0.0
        %1074 = vmatpush1.msra.mxu0 0.0
        %1075 = vmatprep.subr.mxu0 0.0
        %1076 = vmatpush1.msra.mxu0 0.0
        %1077 = vmatprep.subr.mxu0 0.0
        %1078 = vmatpush1.msra.mxu0 0.0
        %1079 = vmatprep.subr.mxu0 0.0
        %1080 = vmatpush1.msra.mxu0 0.0
        %1081 = vmatprep.subr.mxu0 0.0
        %1082 = vmatpush1.msra.mxu0 0.0
        %1083 = vmatprep.subr.mxu0 0.0
        %1084 = vmatpush1.msra.mxu0 0.0
        %1085 = vmatprep.subr.mxu0 0.0
        %1086 = vmatpush1.msra.mxu0 0.0
        %1087 = vmatprep.subr.mxu0 0.0
        %1088 = vmatpush1.msra.mxu0 0.0
        %1089 = vmatprep.subr.mxu0 0.0
        %1090 = vmatpush1.msra.mxu0 0.0
        %1091 = vmatprep.subr.mxu0 0.0
        %1092 = vmatpush1.msra.mxu0 0.0
        %1093 = vmatprep.subr.mxu0 0.0
        %1094 = vmatpush1.msra.mxu0 0.0
        %1095 = vmatprep.subr.mxu0 0.0
        %1096 = vmatpush1.msra.mxu0 0.0
        %1097 = vmatprep.subr.mxu0 0.0
        %1098 = vmatpush1.msra.mxu0 0.0
        %1099 = vmatprep.subr.mxu0 0.0
        %1100 = vmatpush1.msra.mxu0 0.0
        %1101 = vmatprep.subr.mxu0 0.0
        %1102 = vmatpush1.msra.mxu0 0.0
        %1103 = vmatprep.subr.mxu0 0.0
        %1104 = vmatpush1.msra.mxu0 0.0
        %1105 = vmatprep.subr.mxu0 0.0
        %1106 = vmatpush1.msra.mxu0 0.0
        %1107 = vmatprep.subr.mxu0 0.0
        %1108 = vmatpush1.msra.mxu0 0.0
        %1109 = vmatprep.mubr.f32.mxu0 0.0
        %1110 = vmatmul.mubr.f32.gmra.mrb[0].mxu0 %v1034
        %v1111 = vpop.f32.mrb[0].mxu0
        %v1112 = vadd.f32 %v1025, %v1111
        %v1113 = vpop.f32.mrb[0].mxu0
        %v1114 = vadd.f32 %v1025, %v1113
        %1115 = vmatprep.mubr.f32.mxu0 0.0
        %1116 = vmatmul.mubr.f32.gmra.mrb[0].mxu0 %v1037
        %v1117 = vpop.f32.mrb[0].mxu0
        %v1118 = vadd.f32 %v1030, %v1117
        %v1119 = vpop.f32.mrb[0].mxu0
        %v1120 = vadd.f32 %v1030, %v1119
        %1121 = vdwg.mxu0
        %v1122 = vmax.f32 %v1112, 0.0
        %v1123 = vmax.f32 %v1114, 0.0
        %v1124 = vmax.f32 %v1118, 0.0
        %v1125 = vmax.f32 %v1120, 0.0
        %v1126 = vld [vmem:[%s8] sm:$0xf]
        %v1127 = vld [vmem:[%s9] sm:$0xf]
        %1129 = vset.pattern.permute.xlu0 0
        %1130 = vperm.xlu0 %1129, %v1127
        %v1131 = vpop.permute.xlu0 %1130
        %v1134 = vsel %vm519, %v1126, 0
        %1136 = vmatprep.subr.mxu0 %v613
        %1137 = vmatpush1.msra.mxu0 %v611
        %1138 = vmatprep.subr.mxu0 0.0
        %1139 = vmatpush1.msra.mxu0 0.0
        %1140 = vmatprep.subr.mxu0 0.0
        %1141 = vmatpush1.msra.mxu0 0.0
        %1142 = vmatprep.subr.mxu0 0.0
        %1143 = vmatpush1.msra.mxu0 0.0
        %1144 = vmatprep.subr.mxu0 0.0
        %1145 = vmatpush1.msra.mxu0 0.0
        %1146 = vmatprep.subr.mxu0 0.0
        %1147 = vmatpush1.msra.mxu0 0.0
        %1148 = vmatprep.subr.mxu0 0.0
        %1149 = vmatpush1.msra.mxu0 0.0
        %1150 = vmatprep.subr.mxu0 0.0
        %1151 = vmatpush1.msra.mxu0 0.0
        %1152 = vmatprep.subr.mxu0 0.0
        %1153 = vmatpush1.msra.mxu0 0.0
        %1154 = vmatprep.subr.mxu0 0.0
        %1155 = vmatpush1.msra.mxu0 0.0
        %1156 = vmatprep.subr.mxu0 0.0
        %1157 = vmatpush1.msra.mxu0 0.0
        %1158 = vmatprep.subr.mxu0 0.0
        %1159 = vmatpush1.msra.mxu0 0.0
        %1160 = vmatprep.subr.mxu0 0.0
        %1161 = vmatpush1.msra.mxu0 0.0
        %1162 = vmatprep.subr.mxu0 0.0
        %1163 = vmatpush1.msra.mxu0 0.0
        %1164 = vmatprep.subr.mxu0 0.0
        %1165 = vmatpush1.msra.mxu0 0.0
        %1166 = vmatprep.subr.mxu0 0.0
        %1167 = vmatpush1.msra.mxu0 0.0
        %1168 = vmatprep.subr.mxu0 0.0
        %1169 = vmatpush1.msra.mxu0 0.0
        %1170 = vmatprep.subr.mxu0 0.0
        %1171 = vmatpush1.msra.mxu0 0.0
        %1172 = vmatprep.subr.mxu0 0.0
        %1173 = vmatpush1.msra.mxu0 0.0
        %1174 = vmatprep.subr.mxu0 0.0
        %1175 = vmatpush1.msra.mxu0 0.0
        %1176 = vmatprep.subr.mxu0 0.0
        %1177 = vmatpush1.msra.mxu0 0.0
        %1178 = vmatprep.subr.mxu0 0.0
        %1179 = vmatpush1.msra.mxu0 0.0
        %1180 = vmatprep.subr.mxu0 0.0
        %1181 = vmatpush1.msra.mxu0 0.0
        %1182 = vmatprep.subr.mxu0 0.0
        %1183 = vmatpush1.msra.mxu0 0.0
        %1184 = vmatprep.subr.mxu0 0.0
        %1185 = vmatpush1.msra.mxu0 0.0
        %1186 = vmatprep.subr.mxu0 0.0
        %1187 = vmatpush1.msra.mxu0 0.0
        %1188 = vmatprep.subr.mxu0 0.0
        %1189 = vmatpush1.msra.mxu0 0.0
        %1190 = vmatprep.subr.mxu0 0.0
        %1191 = vmatpush1.msra.mxu0 0.0
        %1192 = vmatprep.subr.mxu0 0.0
        %1193 = vmatpush1.msra.mxu0 0.0
        %1194 = vmatprep.subr.mxu0 0.0
        %1195 = vmatpush1.msra.mxu0 0.0
        %1196 = vmatprep.subr.mxu0 0.0
        %1197 = vmatpush1.msra.mxu0 0.0
        %1198 = vmatprep.subr.mxu0 0.0
        %1199 = vmatpush1.msra.mxu0 0.0
        %1200 = vmatprep.mubr.f32.mxu0 0.0
        %1201 = vmatmul.mubr.f32.gmra.mrb[0].mxu0 %v1134
        %v1202 = vpop.f32.mrb[0].mxu0
        %v1203 = vadd.f32 %v1131, %v1202
        %v1204 = vpop.f32.mrb[0].mxu0
        %v1205 = vadd.f32 %v1131, %v1204
        %1206 = vdwg.mxu0
        %1207 = vmatprep.subr.mxu0 0.0
        %1208 = vmatpush1.msra.mxu0 %v615
        %1209 = vmatprep.subr.mxu0 0.0
        %1210 = vmatpush1.msra.mxu0 0.0
        %1211 = vmatprep.subr.mxu0 0.0
        %1212 = vmatpush1.msra.mxu0 0.0
        %1213 = vmatprep.subr.mxu0 0.0
        %1214 = vmatpush1.msra.mxu0 0.0
        %1215 = vmatprep.subr.mxu0 0.0
        %1216 = vmatpush1.msra.mxu0 0.0
        %1217 = vmatprep.subr.mxu0 0.0
        %1218 = vmatpush1.msra.mxu0 0.0
        %1219 = vmatprep.subr.mxu0 0.0
        %1220 = vmatpush1.msra.mxu0 0.0
        %1221 = vmatprep.subr.mxu0 0.0
        %1222 = vmatpush1.msra.mxu0 0.0
        %1223 = vmatprep.subr.mxu0 0.0
        %1224 = vmatpush1.msra.mxu0 0.0
        %1225 = vmatprep.subr.mxu0 0.0
        %1226 = vmatpush1.msra.mxu0 0.0
        %1227 = vmatprep.subr.mxu0 0.0
        %1228 = vmatpush1.msra.mxu0 0.0
        %1229 = vmatprep.subr.mxu0 0.0
        %1230 = vmatpush1.msra.mxu0 0.0
        %1231 = vmatprep.subr.mxu0 0.0
        %1232 = vmatpush1.msra.mxu0 0.0
        %1233 = vmatprep.subr.mxu0 0.0
        %1234 = vmatpush1.msra.mxu0 0.0
        %1235 = vmatprep.subr.mxu0 0.0
        %1236 = vmatpush1.msra.mxu0 0.0
        %1237 = vmatprep.subr.mxu0 0.0
        %1238 = vmatpush1.msra.mxu0 0.0
        %1239 = vmatprep.subr.mxu0 0.0
        %1240 = vmatpush1.msra.mxu0 0.0
        %1241 = vmatprep.subr.mxu0 0.0
        %1242 = vmatpush1.msra.mxu0 0.0
        %1243 = vmatprep.subr.mxu0 0.0
        %1244 = vmatpush1.msra.mxu0 0.0
        %1245 = vmatprep.subr.mxu0 0.0
        %1246 = vmatpush1.msra.mxu0 0.0
        %1247 = vmatprep.subr.mxu0 0.0
        %1248 = vmatpush1.msra.mxu0 0.0
        %1249 = vmatprep.subr.mxu0 0.0
        %1250 = vmatpush1.msra.mxu0 0.0
        %1251 = vmatprep.subr.mxu0 0.0
        %1252 = vmatpush1.msra.mxu0 0.0
        %1253 = vmatprep.subr.mxu0 0.0
        %1254 = vmatpush1.msra.mxu0 0.0
        %1255 = vmatprep.subr.mxu0 0.0
        %1256 = vmatpush1.msra.mxu0 0.0
        %1257 = vmatprep.subr.mxu0 0.0
        %1258 = vmatpush1.msra.mxu0 0.0
        %1259 = vmatprep.subr.mxu0 0.0
        %1260 = vmatpush1.msra.mxu0 0.0
        %1261 = vmatprep.subr.mxu0 0.0
        %1262 = vmatpush1.msra.mxu0 0.0
        %1263 = vmatprep.subr.mxu0 0.0
        %1264 = vmatpush1.msra.mxu0 0.0
        %1265 = vmatprep.subr.mxu0 0.0
        %1266 = vmatpush1.msra.mxu0 0.0
        %1267 = vmatprep.subr.mxu0 0.0
        %1268 = vmatpush1.msra.mxu0 0.0
        %1269 = vmatprep.subr.mxu0 0.0
        %1270 = vmatpush1.msra.mxu0 0.0
        %1271 = vmatprep.mubr.f32.mxu0 0.0
        %1272 = vmatmul.mubr.f32.gmra.mrb[0].mxu0 %v1134
        %v1273 = vpop.f32.mrb[0].mxu0
        %v1274 = vadd.f32 %v1131, %v1273
        %v1275 = vpop.f32.mrb[0].mxu0
        %1276 = vdwg.mxu0
        %v1277 = vmax.f32 %v1203, 0.0
        %v1278 = vmax.f32 %v1205, 0.0
        %v1279 = vmax.f32 %v1274, 0.0
        %v1280 = vsel %vm764, %v1277, 0.0
        %v1281 = vsel %vm765, %v1278, 0.0
        %v1282 = vsel %vm766, %v1279, 0.0
        %v1283 = vlaneseq
        %v1284 = vshrl.u32 %v1283, 7
        %v1285 = vsub.s32 0, %v1284
        %v1286 = vrot.slane %v485, %v1285
        %v1287 = vlaneseq
        %v1288 = vshrl.u32 %v1287, 7
        %v1289 = vsub.s32 0, %v1288
        %v1290 = vrot.slane %v486, %v1289
        %v1291 = vmul.f32 %v1280, %v1286
        %v1292 = vmul.f32 %v1281, %v1290
        %1293 = vst [vmem:[#allocation3] sm:$0xf] %v1291
        %1294 = vst [vmem:[#allocation3 + $0x8] sm:$0xf] %v1292
        %1295 = vrot.lane.b32.xlu0 %v773, 1
        %v1296 = vpop.permute.xlu0 %1295
        %1297 = vrot.lane.b32.xlu0 %v777, 1
        %v1298 = vpop.permute.xlu0 %1297
        %vm1299 = vcmask 7168
        %v1300 = vsel %vm1299, %v1296, %v1298
        %v1304 = vmul.f32 %v1280, %v1296
        %v1305 = vmul.f32 %v1281, %v1300
        %v1306 = vmul.f32 %v1282, %v1298
        %v1310 = vrot.slane %v1304, 4
        %v1311 = vrot.slane %v1305, 4
        %v1312 = vrot.slane %v1306, 4
        %1313 = vrot.lane.b32.xlu0 %v1310, 127
        %v1314 = vpop.permute.xlu0 %1313
        %1315 = vrot.lane.b32.xlu0 %v1311, 127
        %v1316 = vpop.permute.xlu0 %1315
        %1317 = vrot.lane.b32.xlu0 %v1312, 127
        %v1318 = vpop.permute.xlu0 %1317
        %vm1319 = vcmask 1039360
        %v1320 = vsel %vm1319, %v1314, %v1316
        %v1321 = vsel %vm1319, %v1316, %v1318
        %1324 = vst [vmem:[#allocation3] sm:$0xf0] %v1320
        %1325 = vst [vmem:[#allocation3 + $0x8] sm:$0xf0] %v1321
        %1329 = vrot.lane.b32.xlu0 %v1280, 126
        %v1330 = vpop.permute.xlu0 %1329
        %1331 = vrot.lane.b32.xlu0 %v1281, 126
        %v1332 = vpop.permute.xlu0 %1331
        %1333 = vrot.lane.b32.xlu0 %v1282, 126
        %v1334 = vpop.permute.xlu0 %1333
        %vm1335 = vcmask 1031168
        %v1336 = vsel %vm1335, %v1330, %v1332
        %v1337 = vsel %vm1335, %v1332, %v1334
        %1340 = vst [vmem:[#allocation3 + $0x10] sm:$0xf] %v1336
        %1341 = vst [vmem:[#allocation3 + $0x18] sm:$0xf] %v1337
        %1342 = vrot.lane.b32.xlu0 %v830, 3
        %v1343 = vpop.permute.xlu0 %1342
        %1344 = vrot.lane.b32.xlu0 %v834, 3
        %v1345 = vpop.permute.xlu0 %1344
        %vm1346 = vcmask 23552
        %v1347 = vsel %vm1346, %v1343, %v1345
        %v1351 = vmul.f32 %v1280, %v1343
        %v1352 = vmul.f32 %v1281, %v1347
        %v1353 = vmul.f32 %v1282, %v1345
        %v1357 = vrot.slane %v1351, 4
        %v1358 = vrot.slane %v1352, 4
        %v1359 = vrot.slane %v1353, 4
        %1360 = vrot.lane.b32.xlu0 %v1357, 125
        %v1361 = vpop.permute.xlu0 %1360
        %1362 = vrot.lane.b32.xlu0 %v1358, 125
        %v1363 = vpop.permute.xlu0 %1362
        %1364 = vrot.lane.b32.xlu0 %v1359, 125
        %v1365 = vpop.permute.xlu0 %1364
        %vm1366 = vcmask 1022976
        %v1367 = vsel %vm1366, %v1361, %v1363
        %v1368 = vsel %vm1366, %v1363, %v1365
        %1371 = vst [vmem:[#allocation3 + $0x10] sm:$0xf0] %v1367
        %1372 = vst [vmem:[#allocation3 + $0x18] sm:$0xf0] %v1368
        %v1373 = vlaneseq
        %v1374 = vshrl.u32 %v1373, 7
        %v1375 = vsub.s32 4, %v1374
        %v1376 = vrot.slane %v485, %v1375
        %v1377 = vlaneseq
        %v1378 = vshrl.u32 %v1377, 7
        %v1379 = vsub.s32 4, %v1378
        %v1380 = vrot.slane %v486, %v1379
        %1383 = vrot.lane.b32.xlu0 %v1376, 4
        %v1384 = vpop.permute.xlu0 %1383
        %1385 = vrot.lane.b32.xlu0 %v1380, 4
        %v1386 = vpop.permute.xlu0 %1385
        %v1387 = vsel %vm519, %v1384, %v1386
        %v1391 = vmul.f32 %v1280, %v1384
        %v1392 = vmul.f32 %v1281, %v1387
        %v1393 = vmul.f32 %v1282, %v1386
        %1397 = vrot.lane.b32.xlu0 %v1391, 124
        %v1398 = vpop.permute.xlu0 %1397
        %1399 = vrot.lane.b32.xlu0 %v1392, 124
        %v1400 = vpop.permute.xlu0 %1399
        %1401 = vrot.lane.b32.xlu0 %v1393, 124
        %v1402 = vpop.permute.xlu0 %1401
        %vm1403 = vcmask 1014784
        %v1404 = vsel %vm1403, %v1398, %v1400
        %v1405 = vsel %vm1403, %v1400, %v1402
        %1408 = vst [vmem:[#allocation3 + $0x20] sm:$0xf] %v1404
        %1409 = vst [vmem:[#allocation3 + $0x28] sm:$0xf] %v1405
        %1412 = vrot.lane.b32.xlu0 %v1286, 16
        %v1413 = vpop.permute.xlu0 %1412
        %1414 = vrot.lane.b32.xlu0 %v1290, 16
        %v1415 = vpop.permute.xlu0 %1414
        %vm1416 = vcmask 130048
        %v1417 = vsel %vm1416, %v1413, %v1415
        %v1421 = vmul.f32 %v1280, %v1413
        %v1422 = vmul.f32 %v1281, %v1417
        %v1423 = vmul.f32 %v1282, %v1415
        %v1427 = vrot.slane %v1421, 4
        %v1428 = vrot.slane %v1422, 4
        %v1429 = vrot.slane %v1423, 4
        %1430 = vrot.lane.b32.xlu0 %v1427, 112
        %v1431 = vpop.permute.xlu0 %1430
        %1432 = vrot.lane.b32.xlu0 %v1428, 112
        %v1433 = vpop.permute.xlu0 %1432
        %1434 = vrot.lane.b32.xlu0 %v1429, 112
        %v1435 = vpop.permute.xlu0 %1434
        %vm1436 = vcmask 916480
        %v1437 = vsel %vm1436, %v1431, %v1433
        %v1438 = vsel %vm1436, %v1433, %v1435
        %1441 = vst [vmem:[#allocation3 + $0x20] sm:$0xf0] %v1437
        %1442 = vst [vmem:[#allocation3 + $0x28] sm:$0xf0] %v1438
        %v1443 = vmul.f32 %v1280, %v781
        %v1444 = vmul.f32 %v1281, %v785
        %v1445 = vmul.f32 %v1282, %v783
        %1449 = vrot.lane.b32.xlu0 %v1443, 111
        %v1450 = vpop.permute.xlu0 %1449
        %1451 = vrot.lane.b32.xlu0 %v1444, 111
        %v1452 = vpop.permute.xlu0 %1451
        %1453 = vrot.lane.b32.xlu0 %v1445, 111
        %v1454 = vpop.permute.xlu0 %1453
        %v1455 = vsel %vm801, %v1450, %v1452
        %v1456 = vsel %vm801, %v1452, %v1454
        %1459 = vst [vmem:[#allocation3 + $0x30] sm:$0xf] %v1455
        %1460 = vst [vmem:[#allocation3 + $0x38] sm:$0xf] %v1456
        %v1461 = vrot.slane %v1280, 4
        %v1462 = vrot.slane %v1281, 4
        %v1463 = vrot.slane %v1282, 4
        %1464 = vrot.lane.b32.xlu0 %v1461, 110
        %v1465 = vpop.permute.xlu0 %1464
        %1466 = vrot.lane.b32.xlu0 %v1462, 110
        %v1467 = vpop.permute.xlu0 %1466
        %1468 = vrot.lane.b32.xlu0 %v1463, 110
        %v1469 = vpop.permute.xlu0 %1468
        %v1470 = vsel %vm820, %v1465, %v1467
        %v1471 = vsel %vm820, %v1467, %v1469
        %1474 = vst [vmem:[#allocation3 + $0x30] sm:$0xf0] %v1470
        %1475 = vst [vmem:[#allocation3 + $0x38] sm:$0xf0] %v1471
        %v1476 = vmul.f32 %v1280, %v838
        %v1477 = vmul.f32 %v1281, %v842
        %v1478 = vmul.f32 %v1282, %v840
        %1482 = vrot.lane.b32.xlu0 %v1476, 109
        %v1483 = vpop.permute.xlu0 %1482
        %1484 = vrot.lane.b32.xlu0 %v1477, 109
        %v1485 = vpop.permute.xlu0 %1484
        %1486 = vrot.lane.b32.xlu0 %v1478, 109
        %v1487 = vpop.permute.xlu0 %1486
        %v1488 = vsel %vm858, %v1483, %v1485
        %v1489 = vsel %vm858, %v1485, %v1487
        %1492 = vst [vmem:[#allocation3 + $0x40] sm:$0xf] %v1488
        %1493 = vst [vmem:[#allocation3 + $0x48] sm:$0xf] %v1489
        %1494 = vrot.lane.b32.xlu0 %v1376, 20
        %v1495 = vpop.permute.xlu0 %1494
        %1496 = vrot.lane.b32.xlu0 %v1380, 20
        %v1497 = vpop.permute.xlu0 %1496
        %vm1498 = vcmask 162816
        %v1499 = vsel %vm1498, %v1495, %v1497
        %v1503 = vmul.f32 %v1280, %v1495
        %v1504 = vmul.f32 %v1281, %v1499
        %v1505 = vmul.f32 %v1282, %v1497
        %v1509 = vrot.slane %v1503, 4
        %v1510 = vrot.slane %v1504, 4
        %v1511 = vrot.slane %v1505, 4
        %1512 = vrot.lane.b32.xlu0 %v1509, 108
        %v1513 = vpop.permute.xlu0 %1512
        %1514 = vrot.lane.b32.xlu0 %v1510, 108
        %v1515 = vpop.permute.xlu0 %1514
        %1516 = vrot.lane.b32.xlu0 %v1511, 108
        %v1517 = vpop.permute.xlu0 %1516
        %vm1518 = vcmask 883712
        %v1519 = vsel %vm1518, %v1513, %v1515
        %v1520 = vsel %vm1518, %v1515, %v1517
        %1523 = vst [vmem:[#allocation3 + $0x40] sm:$0xf0] %v1519
        %1524 = vst [vmem:[#allocation3 + $0x48] sm:$0xf0] %v1520
        %1525 = vrot.lane.b32.xlu0 %v1286, 32
        %v1526 = vpop.permute.xlu0 %1525
        %1527 = vrot.lane.b32.xlu0 %v1290, 32
        %v1528 = vpop.permute.xlu0 %1527
        %vm1529 = vcmask 261120
        %v1530 = vsel %vm1529, %v1526, %v1528
        %v1534 = vmul.f32 %v1280, %v1526
        %v1535 = vmul.f32 %v1281, %v1530
        %v1536 = vmul.f32 %v1282, %v1528
        %1540 = vrot.lane.b32.xlu0 %v1534, 96
        %v1541 = vpop.permute.xlu0 %1540
        %1542 = vrot.lane.b32.xlu0 %v1535, 96
        %v1543 = vpop.permute.xlu0 %1542
        %1544 = vrot.lane.b32.xlu0 %v1536, 96
        %v1545 = vpop.permute.xlu0 %1544
        %vm1546 = vcmask 785408
        %v1547 = vsel %vm1546, %v1541, %v1543
        %v1548 = vsel %vm1546, %v1543, %v1545
        %1551 = vst [vmem:[#allocation3 + $0x50] sm:$0xf] %v1547
        %1552 = vst [vmem:[#allocation3 + $0x58] sm:$0xf] %v1548
        %v1553 = vmul.f32 %v1280, %v866
        %v1554 = vmul.f32 %v1281, %v870
        %v1555 = vmul.f32 %v1282, %v868
        %v1559 = vrot.slane %v1553, 4
        %v1560 = vrot.slane %v1554, 4
        %v1561 = vrot.slane %v1555, 4
        %1562 = vrot.lane.b32.xlu0 %v1559, 95
        %v1563 = vpop.permute.xlu0 %1562
        %1564 = vrot.lane.b32.xlu0 %v1560, 95
        %v1565 = vpop.permute.xlu0 %1564
        %1566 = vrot.lane.b32.xlu0 %v1561, 95
        %v1567 = vpop.permute.xlu0 %1566
        %v1568 = vsel %vm889, %v1563, %v1565
        %v1569 = vsel %vm889, %v1565, %v1567
        %1572 = vst [vmem:[#allocation3 + $0x50] sm:$0xf0] %v1568
        %1573 = vst [vmem:[#allocation3 + $0x58] sm:$0xf0] %v1569
        %1574 = vrot.lane.b32.xlu0 %v1280, 94
        %v1575 = vpop.permute.xlu0 %1574
        %1576 = vrot.lane.b32.xlu0 %v1281, 94
        %v1577 = vpop.permute.xlu0 %1576
        %1578 = vrot.lane.b32.xlu0 %v1282, 94
        %v1579 = vpop.permute.xlu0 %1578
        %v1580 = vsel %vm516, %v1575, %v1577
        %v1581 = vsel %vm516, %v1577, %v1579
        %1584 = vst [vmem:[#allocation3 + $0x60] sm:$0xf] %v1580
        %1585 = vst [vmem:[#allocation3 + $0x68] sm:$0xf] %v1581
        %v1586 = vmul.f32 %v1280, %v909
        %v1587 = vmul.f32 %v1281, %v913
        %v1588 = vmul.f32 %v1282, %v911
        %v1592 = vrot.slane %v1586, 4
        %v1593 = vrot.slane %v1587, 4
        %v1594 = vrot.slane %v1588, 4
        %1595 = vrot.lane.b32.xlu0 %v1592, 93
        %v1596 = vpop.permute.xlu0 %1595
        %1597 = vrot.lane.b32.xlu0 %v1593, 93
        %v1598 = vpop.permute.xlu0 %1597
        %1599 = vrot.lane.b32.xlu0 %v1594, 93
        %v1600 = vpop.permute.xlu0 %1599
        %v1601 = vsel %vm932, %v1596, %v1598
        %v1602 = vsel %vm932, %v1598, %v1600
        %1605 = vst [vmem:[#allocation3 + $0x60] sm:$0xf0] %v1601
        %1606 = vst [vmem:[#allocation3 + $0x68] sm:$0xf0] %v1602
        %1607 = vrot.lane.b32.xlu0 %v1376, 36
        %v1608 = vpop.permute.xlu0 %1607
        %1609 = vrot.lane.b32.xlu0 %v1380, 36
        %v1610 = vpop.permute.xlu0 %1609
        %v1611 = vsel %vm1032, %v1608, %v1610
        %v1615 = vmul.f32 %v1280, %v1608
        %v1616 = vmul.f32 %v1281, %v1611
        %v1617 = vmul.f32 %v1282, %v1610
        %1621 = vrot.lane.b32.xlu0 %v1615, 92
        %v1622 = vpop.permute.xlu0 %1621
        %1623 = vrot.lane.b32.xlu0 %v1616, 92
        %v1624 = vpop.permute.xlu0 %1623
        %1625 = vrot.lane.b32.xlu0 %v1617, 92
        %v1626 = vpop.permute.xlu0 %1625
        %vm1627 = vcmask 752640
        %v1628 = vsel %vm1627, %v1622, %v1624
        %v1629 = vsel %vm1627, %v1624, %v1626
        %1632 = vst [vmem:[#allocation3 + $0x70] sm:$0xf] %v1628
        %1633 = vst [vmem:[#allocation3 + $0x78] sm:$0xf] %v1629
        %1634 = vrot.lane.b32.xlu0 %v1286, 48
        %v1635 = vpop.permute.xlu0 %1634
        %1636 = vrot.lane.b32.xlu0 %v1290, 48
        %v1637 = vpop.permute.xlu0 %1636
        %vm1638 = vcmask 392192
        %v1639 = vsel %vm1638, %v1635, %v1637
        %v1643 = vmul.f32 %v1280, %v1635
        %v1644 = vmul.f32 %v1281, %v1639
        %v1645 = vmul.f32 %v1282, %v1637
        %v1649 = vrot.slane %v1643, 4
        %v1650 = vrot.slane %v1644, 4
        %v1651 = vrot.slane %v1645, 4
        %1652 = vrot.lane.b32.xlu0 %v1649, 80
        %v1653 = vpop.permute.xlu0 %1652
        %1654 = vrot.lane.b32.xlu0 %v1650, 80
        %v1655 = vpop.permute.xlu0 %1654
        %1656 = vrot.lane.b32.xlu0 %v1651, 80
        %v1657 = vpop.permute.xlu0 %1656
        %vm1658 = vcmask 654336
        %v1659 = vsel %vm1658, %v1653, %v1655
        %v1660 = vsel %vm1658, %v1655, %v1657
        %1663 = vst [vmem:[#allocation3 + $0x70] sm:$0xf0] %v1659
        %1664 = vst [vmem:[#allocation3 + $0x78] sm:$0xf0] %v1660
        %v1665 = vmul.f32 %v1280, %v940
        %v1666 = vmul.f32 %v1281, %v944
        %v1667 = vmul.f32 %v1282, %v942
        %1671 = vrot.lane.b32.xlu0 %v1665, 79
        %v1672 = vpop.permute.xlu0 %1671
        %1673 = vrot.lane.b32.xlu0 %v1666, 79
        %v1674 = vpop.permute.xlu0 %1673
        %1675 = vrot.lane.b32.xlu0 %v1667, 79
        %v1676 = vpop.permute.xlu0 %1675
        %v1677 = vsel %vm960, %v1672, %v1674
        %v1678 = vsel %vm960, %v1674, %v1676
        %1681 = vst [vmem:[#allocation3 + $0x80] sm:$0xf] %v1677
        %1682 = vst [vmem:[#allocation3 + $0x88] sm:$0xf] %v1678
        %1683 = vrot.lane.b32.xlu0 %v1461, 78
        %v1684 = vpop.permute.xlu0 %1683
        %1685 = vrot.lane.b32.xlu0 %v1462, 78
        %v1686 = vpop.permute.xlu0 %1685
        %1687 = vrot.lane.b32.xlu0 %v1463, 78
        %v1688 = vpop.permute.xlu0 %1687
        %v1689 = vsel %vm973, %v1684, %v1686
        %v1690 = vsel %vm973, %v1686, %v1688
        %1693 = vst [vmem:[#allocation3 + $0x80] sm:$0xf0] %v1689
        %1694 = vst [vmem:[#allocation3 + $0x88] sm:$0xf0] %v1690
        %v1695 = vmul.f32 %v1280, %v981
        %v1696 = vmul.f32 %v1281, %v985
        %v1697 = vmul.f32 %v1282, %v983
        %1701 = vrot.lane.b32.xlu0 %v1695, 77
        %v1702 = vpop.permute.xlu0 %1701
        %1703 = vrot.lane.b32.xlu0 %v1696, 77
        %v1704 = vpop.permute.xlu0 %1703
        %1705 = vrot.lane.b32.xlu0 %v1697, 77
        %v1706 = vpop.permute.xlu0 %1705
        %v1707 = vsel %vm1001, %v1702, %v1704
        %v1708 = vsel %vm1001, %v1704, %v1706
        %1711 = vst [vmem:[#allocation3 + $0x90] sm:$0xf] %v1707
        %1712 = vst [vmem:[#allocation3 + $0x98] sm:$0xf] %v1708
        %1713 = vrot.lane.b32.xlu0 %v1376, 52
        %v1714 = vpop.permute.xlu0 %1713
        %1715 = vrot.lane.b32.xlu0 %v1380, 52
        %v1716 = vpop.permute.xlu0 %1715
        %vm1717 = vcmask 424960
        %v1718 = vsel %vm1717, %v1714, %v1716
        %v1722 = vmul.f32 %v1280, %v1714
        %v1723 = vmul.f32 %v1281, %v1718
        %v1724 = vmul.f32 %v1282, %v1716
        %v1728 = vrot.slane %v1722, 4
        %v1729 = vrot.slane %v1723, 4
        %v1730 = vrot.slane %v1724, 4
        %1731 = vrot.lane.b32.xlu0 %v1728, 76
        %v1732 = vpop.permute.xlu0 %1731
        %1733 = vrot.lane.b32.xlu0 %v1729, 76
        %v1734 = vpop.permute.xlu0 %1733
        %1735 = vrot.lane.b32.xlu0 %v1730, 76
        %v1736 = vpop.permute.xlu0 %1735
        %vm1737 = vcmask 621568
        %v1738 = vsel %vm1737, %v1732, %v1734
        %v1739 = vsel %vm1737, %v1734, %v1736
        %1742 = vst [vmem:[#allocation3 + $0x90] sm:$0xf0] %v1738
        %1743 = vst [vmem:[#allocation3 + $0x98] sm:$0xf0] %v1739
        %1744 = vrot.lane.b32.xlu0 %v1286, 64
        %v1745 = vpop.permute.xlu0 %1744
        %1746 = vrot.lane.b32.xlu0 %v1290, 64
        %v1747 = vpop.permute.xlu0 %1746
        %vm1748 = vcmask 523264
        %v1749 = vsel %vm1748, %v1745, %v1747
        %v1753 = vmul.f32 %v1280, %v1745
        %v1754 = vmul.f32 %v1281, %v1749
        %v1755 = vmul.f32 %v1282, %v1747
        %1759 = vrot.lane.b32.xlu0 %v1753, 64
        %v1760 = vpop.permute.xlu0 %1759
        %1761 = vrot.lane.b32.xlu0 %v1754, 64
        %v1762 = vpop.permute.xlu0 %1761
        %1763 = vrot.lane.b32.xlu0 %v1755, 64
        %v1764 = vpop.permute.xlu0 %1763
        %v1765 = vsel %vm1748, %v1760, %v1762
        %v1766 = vsel %vm1748, %v1762, %v1764
        %1769 = vst [vmem:[#allocation3 + $0xa0] sm:$0xf] %v1765
        %1770 = vst [vmem:[#allocation3 + $0xa8] sm:$0xf] %v1766
        %1771 = vrot.lane.b32.xlu0 %v773, 65
        %v1772 = vpop.permute.xlu0 %1771
        %1773 = vrot.lane.b32.xlu0 %v777, 65
        %v1774 = vpop.permute.xlu0 %1773
        %vm1775 = vcmask 531456
        %v1776 = vsel %vm1775, %v1772, %v1774
        %v1780 = vmul.f32 %v1280, %v1772
        %v1781 = vmul.f32 %v1281, %v1776
        %v1782 = vmul.f32 %v1282, %v1774
        %v1786 = vrot.slane %v1780, 4
        %v1787 = vrot.slane %v1781, 4
        %v1788 = vrot.slane %v1782, 4
        %1789 = vrot.lane.b32.xlu0 %v1786, 63
        %v1790 = vpop.permute.xlu0 %1789
        %1791 = vrot.lane.b32.xlu0 %v1787, 63
        %v1792 = vpop.permute.xlu0 %1791
        %1793 = vrot.lane.b32.xlu0 %v1788, 63
        %v1794 = vpop.permute.xlu0 %1793
        %vm1795 = vcmask 515072
        %v1796 = vsel %vm1795, %v1790, %v1792
        %v1797 = vsel %vm1795, %v1792, %v1794
        %1800 = vst [vmem:[#allocation3 + $0xa0] sm:$0xf0] %v1796
        %1801 = vst [vmem:[#allocation3 + $0xa8] sm:$0xf0] %v1797
        %1802 = vrot.lane.b32.xlu0 %v1280, 62
        %v1803 = vpop.permute.xlu0 %1802
        %1804 = vrot.lane.b32.xlu0 %v1281, 62
        %v1805 = vpop.permute.xlu0 %1804
        %1806 = vrot.lane.b32.xlu0 %v1282, 62
        %v1807 = vpop.permute.xlu0 %1806
        %vm1808 = vcmask 506880
        %v1809 = vsel %vm1808, %v1803, %v1805
        %v1810 = vsel %vm1808, %v1805, %v1807
        %1813 = vst [vmem:[#allocation3 + $0xb0] sm:$0xf] %v1809
        %1814 = vst [vmem:[#allocation3 + $0xb8] sm:$0xf] %v1810
        %1815 = vrot.lane.b32.xlu0 %v830, 67
        %v1816 = vpop.permute.xlu0 %1815
        %1817 = vrot.lane.b32.xlu0 %v834, 67
        %v1818 = vpop.permute.xlu0 %1817
        %vm1819 = vcmask 547840
        %v1820 = vsel %vm1819, %v1816, %v1818
        %v1824 = vmul.f32 %v1280, %v1816
        %v1825 = vmul.f32 %v1281, %v1820
        %v1826 = vmul.f32 %v1282, %v1818
        %v1830 = vrot.slane %v1824, 4
        %v1831 = vrot.slane %v1825, 4
        %v1832 = vrot.slane %v1826, 4
        %1833 = vrot.lane.b32.xlu0 %v1830, 61
        %v1834 = vpop.permute.xlu0 %1833
        %1835 = vrot.lane.b32.xlu0 %v1831, 61
        %v1836 = vpop.permute.xlu0 %1835
        %1837 = vrot.lane.b32.xlu0 %v1832, 61
        %v1838 = vpop.permute.xlu0 %1837
        %vm1839 = vcmask 498688
        %v1840 = vsel %vm1839, %v1834, %v1836
        %v1841 = vsel %vm1839, %v1836, %v1838
        %1844 = vst [vmem:[#allocation3 + $0xb0] sm:$0xf0] %v1840
        %1845 = vst [vmem:[#allocation3 + $0xb8] sm:$0xf0] %v1841
        %1846 = vrot.lane.b32.xlu0 %v1376, 68
        %v1847 = vpop.permute.xlu0 %1846
        %1848 = vrot.lane.b32.xlu0 %v1380, 68
        %v1849 = vpop.permute.xlu0 %1848
        %vm1850 = vcmask 556032
        %v1851 = vsel %vm1850, %v1847, %v1849
        %v1855 = vmul.f32 %v1280, %v1847
        %v1856 = vmul.f32 %v1281, %v1851
        %v1857 = vmul.f32 %v1282, %v1849
        %1861 = vrot.lane.b32.xlu0 %v1855, 60
        %v1862 = vpop.permute.xlu0 %1861
        %1863 = vrot.lane.b32.xlu0 %v1856, 60
        %v1864 = vpop.permute.xlu0 %1863
        %1865 = vrot.lane.b32.xlu0 %v1857, 60
        %v1866 = vpop.permute.xlu0 %1865
        %vm1867 = vcmask 490496
        %v1868 = vsel %vm1867, %v1862, %v1864
        %v1869 = vsel %vm1867, %v1864, %v1866
        %1872 = vst [vmem:[#allocation3 + $0xc0] sm:$0xf] %v1868
        %1873 = vst [vmem:[#allocation3 + $0xc8] sm:$0xf] %v1869
        %v1874 = vld [vmem:[%s10] sm:$0xff]
        %v1875 = vld [vmem:[#allocation3] sm:$0xff]
        %v1876 = vld [vmem:[#allocation3 + $0x8] sm:$0xff]
        %v1877 = vld [vmem:[#allocation3 + $0x10] sm:$0xff]
        %v1878 = vld [vmem:[#allocation3 + $0x18] sm:$0xff]
        %v1879 = vld [vmem:[#allocation3 + $0x20] sm:$0xff]
        %v1880 = vld [vmem:[#allocation3 + $0x28] sm:$0xff]
        %v1881 = vld [vmem:[#allocation3 + $0x30] sm:$0xff]
        %v1882 = vld [vmem:[#allocation3 + $0x38] sm:$0xff]
        %v1883 = vld [vmem:[#allocation3 + $0x40] sm:$0xff]
        %v1884 = vld [vmem:[#allocation3 + $0x48] sm:$0xff]
        %v1885 = vld [vmem:[#allocation3 + $0x50] sm:$0xff]
        %v1886 = vld [vmem:[#allocation3 + $0x58] sm:$0xff]
        %v1887 = vld [vmem:[#allocation3 + $0x60] sm:$0xff]
        %v1888 = vld [vmem:[#allocation3 + $0x68] sm:$0xff]
        %v1889 = vld [vmem:[#allocation3 + $0x70] sm:$0xff]
        %v1890 = vld [vmem:[#allocation3 + $0x78] sm:$0xff]
        %v1891 = vld [vmem:[#allocation3 + $0x80] sm:$0xff]
        %v1892 = vld [vmem:[#allocation3 + $0x88] sm:$0xff]
        %v1893 = vld [vmem:[#allocation3 + $0x90] sm:$0xff]
        %v1894 = vld [vmem:[#allocation3 + $0x98] sm:$0xff]
        %v1895 = vld [vmem:[#allocation3 + $0xa0] sm:$0xff]
        %v1896 = vld [vmem:[#allocation3 + $0xa8] sm:$0xff]
        %v1897 = vld [vmem:[#allocation3 + $0xb0] sm:$0xff]
        %v1898 = vld [vmem:[#allocation3 + $0xb8] sm:$0xff]
        %v1899 = vld [vmem:[#allocation3 + $0xc0] sm:$0xf]
        %v1900 = vld [vmem:[#allocation3 + $0xc8] sm:$0xf]
        %v1901 = vld [vmem:[%s11] sm:$0xff]
        %1903 = vset.pattern.permute.xlu0 0
        %1904 = vperm.xlu0 %1903, %v1901
        %v1905 = vpop.permute.xlu0 %1904
        %vm1907 = vcmask 818176
        %v1909 = vsel %vm1907, %v1874, 0
        %v1912 = vsel %vm523, %v1899, 0
        %v1915 = vsel %vm523, %v1900, 0
        %1917 = vmatprep.subr.mxu0 %v1876
        %1918 = vmatpush1.msra.mxu0 %v1875
        %1919 = vmatprep.subr.mxu0 %v1878
        %1920 = vmatpush1.msra.mxu0 %v1877
        %1921 = vmatprep.subr.mxu0 %v1880
        %1922 = vmatpush1.msra.mxu0 %v1879
        %1923 = vmatprep.subr.mxu0 %v1882
        %1924 = vmatpush1.msra.mxu0 %v1881
        %1925 = vmatprep.subr.mxu0 %v1884
        %1926 = vmatpush1.msra.mxu0 %v1883
        %1927 = vmatprep.subr.mxu0 %v1886
        %1928 = vmatpush1.msra.mxu0 %v1885
        %1929 = vmatprep.subr.mxu0 %v1888
        %1930 = vmatpush1.msra.mxu0 %v1887
        %1931 = vmatprep.subr.mxu0 %v1890
        %1932 = vmatpush1.msra.mxu0 %v1889
        %1933 = vmatprep.subr.mxu0 %v1892
        %1934 = vmatpush1.msra.mxu0 %v1891
        %1935 = vmatprep.subr.mxu0 %v1894
        %1936 = vmatpush1.msra.mxu0 %v1893
        %1937 = vmatprep.subr.mxu0 %v1896
        %1938 = vmatpush1.msra.mxu0 %v1895
        %1939 = vmatprep.subr.mxu0 %v1898
        %1940 = vmatpush1.msra.mxu0 %v1897
        %1941 = vmatprep.subr.mxu0 %v1915
        %1942 = vmatpush1.msra.mxu0 %v1912
        %1943 = vmatprep.subr.mxu0 0.0
        %1944 = vmatpush1.msra.mxu0 0.0
        %1945 = vmatprep.subr.mxu0 0.0
        %1946 = vmatpush1.msra.mxu0 0.0
        %1947 = vmatprep.subr.mxu0 0.0
        %1948 = vmatpush1.msra.mxu0 0.0
        %1949 = vmatprep.subr.mxu0 0.0
        %1950 = vmatpush1.msra.mxu0 0.0
        %1951 = vmatprep.subr.mxu0 0.0
        %1952 = vmatpush1.msra.mxu0 0.0
        %1953 = vmatprep.subr.mxu0 0.0
        %1954 = vmatpush1.msra.mxu0 0.0
        %1955 = vmatprep.subr.mxu0 0.0
        %1956 = vmatpush1.msra.mxu0 0.0
        %1957 = vmatprep.subr.mxu0 0.0
        %1958 = vmatpush1.msra.mxu0 0.0
        %1959 = vmatprep.subr.mxu0 0.0
        %1960 = vmatpush1.msra.mxu0 0.0
        %1961 = vmatprep.subr.mxu0 0.0
        %1962 = vmatpush1.msra.mxu0 0.0
        %1963 = vmatprep.subr.mxu0 0.0
        %1964 = vmatpush1.msra.mxu0 0.0
        %1965 = vmatprep.subr.mxu0 0.0
        %1966 = vmatpush1.msra.mxu0 0.0
        %1967 = vmatprep.subr.mxu0 0.0
        %1968 = vmatpush1.msra.mxu0 0.0
        %1969 = vmatprep.subr.mxu0 0.0
        %1970 = vmatpush1.msra.mxu0 0.0
        %1971 = vmatprep.subr.mxu0 0.0
        %1972 = vmatpush1.msra.mxu0 0.0
        %1973 = vmatprep.subr.mxu0 0.0
        %1974 = vmatpush1.msra.mxu0 0.0
        %1975 = vmatprep.subr.mxu0 0.0
        %1976 = vmatpush1.msra.mxu0 0.0
        %1977 = vmatprep.subr.mxu0 0.0
        %1978 = vmatpush1.msra.mxu0 0.0
        %1979 = vmatprep.subr.mxu0 0.0
        %1980 = vmatpush1.msra.mxu0 0.0
        %1981 = vmatprep.mubr.f32.mxu0 0.0
        %1982 = vmatmul.mubr.f32.gmra.mrb[0].mxu0 %v1909
        %v1983 = vpop.f32.mrb[0].mxu0
        %v1984 = vadd.f32 %v1905, %v1983
        %v1985 = vpop.f32.mrb[0].mxu0
        %v1986 = vadd.f32 %v1905, %v1985
        %1987 = vdwg.mxu0
        %v1988 = vmax.f32 %v1984, 0.0
        %v1989 = vmax.f32 %v1986, 0.0
        %v1991 = vsel %vm764, %v483, -1e+30
        %v1992 = vsel %vm765, %v509, -1e+30
        %v1993 = vsel %vm766, %v484, -1e+30
        %vm1994 = vcmp.gt.f32.partialorder %v485, 0.5
        %vm1995 = vcmp.gt.f32.partialorder %v486, 0.5
        %v1996 = vsel %vm1994, 1, 0
        %v1997 = vsel %vm1995, 1, 0
        %v1998 = vlaneseq
        %v1999 = vshrl.u32 %v1998, 7
        %v2000 = vsub.s32 1, %v1999
        %v2001 = vrot.slane %v1996, %v2000
        %v2002 = vlaneseq
        %v2003 = vshrl.u32 %v2002, 7
        %v2004 = vsub.s32 1, %v2003
        %v2005 = vrot.slane %v1997, %v2004
        %vm2006 = vcmp.eq.s32.totalorder %v2001, 1
        %vm2007 = vcmp.eq.s32.totalorder %v2005, 1
        %2011 = vrot.lane.b32.xlu0 %v1991, 111
        %v2012 = vpop.permute.xlu0 %2011
        %2013 = vrot.lane.b32.xlu0 %v1992, 111
        %v2014 = vpop.permute.xlu0 %2013
        %2015 = vrot.lane.b32.xlu0 %v1993, 111
        %v2016 = vpop.permute.xlu0 %2015
        %v2017 = vsel %vm801, %v2012, %v2014
        %v2018 = vsel %vm801, %v2014, %v2016
        %v2021 = vsel %vm2006, %v2017, -1e+30
        %v2022 = vsel %vm2007, %v2018, -1e+30
        %2023 = vrot.lane.b32.xlu0 %v1991, 110
        %v2024 = vpop.permute.xlu0 %2023
        %2025 = vrot.lane.b32.xlu0 %v1992, 110
        %v2026 = vpop.permute.xlu0 %2025
        %2027 = vrot.lane.b32.xlu0 %v1993, 110
        %v2028 = vpop.permute.xlu0 %2027
        %v2029 = vsel %vm820, %v2024, %v2026
        %v2030 = vsel %vm820, %v2026, %v2028
        %v2033 = vmax.f32 %v2021, %v2029
        %v2034 = vmax.f32 %v2022, %v2030
        %v2035 = vlaneseq
        %v2036 = vshrl.u32 %v2035, 7
        %v2037 = vsub.s32 3, %v2036
        %v2038 = vrot.slane %v1996, %v2037
        %v2039 = vlaneseq
        %v2040 = vshrl.u32 %v2039, 7
        %v2041 = vsub.s32 3, %v2040
        %v2042 = vrot.slane %v1997, %v2041
        %vm2043 = vcmp.eq.s32.totalorder %v2038, 1
        %vm2044 = vcmp.eq.s32.totalorder %v2042, 1
        %2045 = vrot.lane.b32.xlu0 %v1991, 109
        %v2046 = vpop.permute.xlu0 %2045
        %2047 = vrot.lane.b32.xlu0 %v1992, 109
        %v2048 = vpop.permute.xlu0 %2047
        %2049 = vrot.lane.b32.xlu0 %v1993, 109
        %v2050 = vpop.permute.xlu0 %2049
        %v2051 = vsel %vm858, %v2046, %v2048
        %v2052 = vsel %vm858, %v2048, %v2050
        %v2055 = vsel %vm2043, %v2051, -1e+30
        %v2056 = vsel %vm2044, %v2052, -1e+30
        %v2057 = vmax.f32 %v2033, %v2055
        %v2058 = vmax.f32 %v2034, %v2056
        %2059 = vrot.lane.b32.xlu0 %v1991, 95
        %v2060 = vpop.permute.xlu0 %2059
        %2061 = vrot.lane.b32.xlu0 %v1992, 95
        %v2062 = vpop.permute.xlu0 %2061
        %2063 = vrot.lane.b32.xlu0 %v1993, 95
        %v2064 = vpop.permute.xlu0 %2063
        %v2065 = vsel %vm889, %v2060, %v2062
        %v2066 = vsel %vm889, %v2062, %v2064
        %v2069 = vsel %vm2006, %v2065, -1e+30
        %v2070 = vsel %vm2007, %v2066, -1e+30
        %v2071 = vmax.f32 %v2057, %v2069
        %v2072 = vmax.f32 %v2058, %v2070
        %2073 = vrot.lane.b32.xlu0 %v1991, 94
        %v2074 = vpop.permute.xlu0 %2073
        %2075 = vrot.lane.b32.xlu0 %v1992, 94
        %v2076 = vpop.permute.xlu0 %2075
        %2077 = vrot.lane.b32.xlu0 %v1993, 94
        %v2078 = vpop.permute.xlu0 %2077
        %v2079 = vsel %vm516, %v2074, %v2076
        %v2080 = vsel %vm516, %v2076, %v2078
        %v2083 = vmax.f32 %v2071, %v2079
        %v2084 = vmax.f32 %v2072, %v2080
        %2085 = vrot.lane.b32.xlu0 %v1991, 93
        %v2086 = vpop.permute.xlu0 %2085
        %2087 = vrot.lane.b32.xlu0 %v1992, 93
        %v2088 = vpop.permute.xlu0 %2087
        %2089 = vrot.lane.b32.xlu0 %v1993, 93
        %v2090 = vpop.permute.xlu0 %2089
        %v2091 = vsel %vm932, %v2086, %v2088
        %v2092 = vsel %vm932, %v2088, %v2090
        %v2095 = vsel %vm2043, %v2091, -1e+30
        %v2096 = vsel %vm2044, %v2092, -1e+30
        %v2097 = vmax.f32 %v2083, %v2095
        %v2098 = vmax.f32 %v2084, %v2096
        %2099 = vrot.lane.b32.xlu0 %v1991, 79
        %v2100 = vpop.permute.xlu0 %2099
        %2101 = vrot.lane.b32.xlu0 %v1992, 79
        %v2102 = vpop.permute.xlu0 %2101
        %2103 = vrot.lane.b32.xlu0 %v1993, 79
        %v2104 = vpop.permute.xlu0 %2103
        %v2105 = vsel %vm960, %v2100, %v2102
        %v2106 = vsel %vm960, %v2102, %v2104
        %v2109 = vsel %vm2006, %v2105, -1e+30
        %v2110 = vsel %vm2007, %v2106, -1e+30
        %v2111 = vmax.f32 %v2097, %v2109
        %v2112 = vmax.f32 %v2098, %v2110
        %2113 = vrot.lane.b32.xlu0 %v1991, 78
        %v2114 = vpop.permute.xlu0 %2113
        %2115 = vrot.lane.b32.xlu0 %v1992, 78
        %v2116 = vpop.permute.xlu0 %2115
        %2117 = vrot.lane.b32.xlu0 %v1993, 78
        %v2118 = vpop.permute.xlu0 %2117
        %v2119 = vsel %vm973, %v2114, %v2116
        %v2120 = vsel %vm973, %v2116, %v2118
        %v2123 = vmax.f32 %v2111, %v2119
        %v2124 = vmax.f32 %v2112, %v2120
        %2125 = vrot.lane.b32.xlu0 %v1991, 77
        %v2126 = vpop.permute.xlu0 %2125
        %2127 = vrot.lane.b32.xlu0 %v1992, 77
        %v2128 = vpop.permute.xlu0 %2127
        %2129 = vrot.lane.b32.xlu0 %v1993, 77
        %v2130 = vpop.permute.xlu0 %2129
        %v2131 = vsel %vm1001, %v2126, %v2128
        %v2132 = vsel %vm1001, %v2128, %v2130
        %v2135 = vsel %vm2043, %v2131, -1e+30
        %v2136 = vsel %vm2044, %v2132, -1e+30
        %v2137 = vmax.f32 %v2123, %v2135
        %v2138 = vmax.f32 %v2124, %v2136
        %v2139 = vld [vmem:[%s12] sm:$0xff]
        %v2140 = vld [vmem:[%s13] sm:$0xff]
        %2142 = vset.pattern.permute.xlu0 0
        %2143 = vperm.xlu0 %2142, %v2140
        %v2144 = vpop.permute.xlu0 %2143
        %v2147 = vsel %vm519, %v2139, 0
        %v2150 = vsel %vm523, %v2137, 0
        %v2153 = vsel %vm523, %v2138, 0
        %2155 = vmatprep.subr.mxu0 %v2153
        %2156 = vmatpush1.msra.mxu0 %v2150
        %2157 = vmatprep.subr.mxu0 0.0
        %2158 = vmatpush1.msra.mxu0 0.0
        %2159 = vmatprep.subr.mxu0 0.0
        %2160 = vmatpush1.msra.mxu0 0.0
        %2161 = vmatprep.subr.mxu0 0.0
        %2162 = vmatpush1.msra.mxu0 0.0
        %2163 = vmatprep.subr.mxu0 0.0
        %2164 = vmatpush1.msra.mxu0 0.0
        %2165 = vmatprep.subr.mxu0 0.0
        %2166 = vmatpush1.msra.mxu0 0.0
        %2167 = vmatprep.subr.mxu0 0.0
        %2168 = vmatpush1.msra.mxu0 0.0
        %2169 = vmatprep.subr.mxu0 0.0
        %2170 = vmatpush1.msra.mxu0 0.0
        %2171 = vmatprep.subr.mxu0 0.0
        %2172 = vmatpush1.msra.mxu0 0.0
        %2173 = vmatprep.subr.mxu0 0.0
        %2174 = vmatpush1.msra.mxu0 0.0
        %2175 = vmatprep.subr.mxu0 0.0
        %2176 = vmatpush1.msra.mxu0 0.0
        %2177 = vmatprep.subr.mxu0 0.0
        %2178 = vmatpush1.msra.mxu0 0.0
        %2179 = vmatprep.subr.mxu0 0.0
        %2180 = vmatpush1.msra.mxu0 0.0
        %2181 = vmatprep.subr.mxu0 0.0
        %2182 = vmatpush1.msra.mxu0 0.0
        %2183 = vmatprep.subr.mxu0 0.0
        %2184 = vmatpush1.msra.mxu0 0.0
        %2185 = vmatprep.subr.mxu0 0.0
        %2186 = vmatpush1.msra.mxu0 0.0
        %2187 = vmatprep.subr.mxu0 0.0
        %2188 = vmatpush1.msra.mxu0 0.0
        %2189 = vmatprep.subr.mxu0 0.0
        %2190 = vmatpush1.msra.mxu0 0.0
        %2191 = vmatprep.subr.mxu0 0.0
        %2192 = vmatpush1.msra.mxu0 0.0
        %2193 = vmatprep.subr.mxu0 0.0
        %2194 = vmatpush1.msra.mxu0 0.0
        %2195 = vmatprep.subr.mxu0 0.0
        %2196 = vmatpush1.msra.mxu0 0.0
        %2197 = vmatprep.subr.mxu0 0.0
        %2198 = vmatpush1.msra.mxu0 0.0
        %2199 = vmatprep.subr.mxu0 0.0
        %2200 = vmatpush1.msra.mxu0 0.0
        %2201 = vmatprep.subr.mxu0 0.0
        %2202 = vmatpush1.msra.mxu0 0.0
        %2203 = vmatprep.subr.mxu0 0.0
        %2204 = vmatpush1.msra.mxu0 0.0
        %2205 = vmatprep.subr.mxu0 0.0
        %2206 = vmatpush1.msra.mxu0 0.0
        %2207 = vmatprep.subr.mxu0 0.0
        %2208 = vmatpush1.msra.mxu0 0.0
        %2209 = vmatprep.subr.mxu0 0.0
        %2210 = vmatpush1.msra.mxu0 0.0
        %2211 = vmatprep.subr.mxu0 0.0
        %2212 = vmatpush1.msra.mxu0 0.0
        %2213 = vmatprep.subr.mxu0 0.0
        %2214 = vmatpush1.msra.mxu0 0.0
        %2215 = vmatprep.subr.mxu0 0.0
        %2216 = vmatpush1.msra.mxu0 0.0
        %2217 = vmatprep.subr.mxu0 0.0
        %2218 = vmatpush1.msra.mxu0 0.0
        %2219 = vmatprep.mubr.f32.mxu0 0.0
        %2220 = vmatmul.mubr.f32.gmra.mrb[0].mxu0 %v2147
        %v2221 = vpop.f32.mrb[0].mxu0
        %v2222 = vadd.f32 %v2144, %v2221
        %v2223 = vpop.f32.mrb[0].mxu0
        %v2224 = vadd.f32 %v2144, %v2223
        %2225 = vdwg.mxu0
        %v2226 = vmax.f32 %v2222, 0.0
        %v2227 = vmax.f32 %v2224, 0.0
        %2228 = vst [vmem:[%s460] sm:$0xff] %v599
        %2229 = vst [vmem:[%s460 + $0x8] sm:$0xff] %v600
        %2230 = vst [vmem:[%s460 + $0x10] sm:$0xff] %v1122
        %2231 = vst [vmem:[%s460 + $0x18] sm:$0xff] %v1123
        %2232 = vst [vmem:[%s460 + $0x20] sm:$0xff] %v1124
        %2233 = vst [vmem:[%s460 + $0x28] sm:$0xff] %v1125
        %2234 = vst [vmem:[%s460 + $0x30] sm:$0xff] %v1988
        %2235 = vst [vmem:[%s460 + $0x38] sm:$0xff] %v1989
        %2236 = vst [vmem:[%s460 + $0x40] sm:$0xff] %v2226
        %2237 = vst [vmem:[%s460 + $0x48] sm:$0xff] %v2227
        %s2238 = sand.u32 %s335, 1
        %s2239 = scalar_lea.sflag [#allocation5], %s2238
        %s2240 = sand.u32 %s335, 1
        %s2241 = smul.addr %s2240, 80
        %s2242 = scalar_lea.vmem [#allocation4], %s2241
        // Predicated region
        $region77: #{tpu_custom_call.1} parent=75 // pred_check
          %p2243 = pneg %p345
        $region78: #{tpu_custom_call.1} parent=75 // pred_check_branch
          %2245 = sbr.rel (%p2243) target = $region80
        $region79: #{tpu_custom_call.1} parent=75 // pred_region
          %s2247 = ssub.s32 1280, 1280
          %2248 = vsyncadd %s2239, %s2247
          %s2249 = smul.addr %s28, 10
          %s2250 = smul.addr %s2249, 128
          %s2251 = scalar_lea.hbm %s14, %s2250
          %s2252 = sshll.u32 %s2242, 4
          %s2253 = int_to_ptr.vmem [resolvable:$true] %s2252
          %2258 = dma.vmem_to_hbm [thread:$0]  %s2253, 1280, %s2251, %s2239, 256, 256, 16
        $region80: #{tpu_custom_call.1} parent=75 // pred_fallthru
          _
      $region76: #{tpu_custom_call.1} parent=5 // pred_fallthru
        _
      %p2259 = scmp.le.s32.totalorder 2, %s23
      // Predicated region
      $region81: #{tpu_custom_call.1} parent=5 // pred_check
        %p2260 = pneg %p2259
      $region82: #{tpu_custom_call.1} parent=5 // pred_check_branch
        %2262 = sbr.rel (%p2260) target = $region84
      $region83: #{tpu_custom_call.1} parent=5 // pred_region
        %s2263 = ssub.s32 %s23, 2
        // Predicated region
        $region85: #{tpu_custom_call.1} parent=83 // pred_check
          %p2264 = pneg %p351
        $region86: #{tpu_custom_call.1} parent=83 // pred_check_branch
          %2266 = sbr.rel (%p2264) target = $region88
        $region87: #{tpu_custom_call.1} parent=83 // pred_region
          %s2267 = sand.u32 %s336, 1
          %s2268 = scalar_lea.sflag [#allocation5], %s2267
          %s2269 = sand.u32 %s336, 1
          %s2270 = smul.addr %s2269, 80
          %s2271 = scalar_lea.vmem [#allocation4], %s2270
          %2272 = dma.done %s2268, 1280
        $region88: #{tpu_custom_call.1} parent=83 // pred_fallthru
          _
      $region84: #{tpu_custom_call.1} parent=5 // pred_fallthru
        _
    $region6: #{tpu_custom_call.1} parent=1 // loop_footer
      %s27 = sadd.s32 1, %s23
    $region7: #{tpu_custom_call.1} parent=1 // loop_footer_branch
      %22 = sbr.rel target = $region3
    $region8: #{tpu_custom_call.1} parent=1 // loop_exit
      _
    %2273 = vsyncpa [#allocation5], 1
    %s2274 = scalar_lea.sflag [#allocation5], 1
    %2275 = vsyncpa %s2274, 1

</llo_original>
